<compile_context>
chip_gen: v7x
topology: tpu7x:2x2x1
jax: 0.10.0
libtpu: 0.0.40
codegen_flags: <defaults>
</compile_context>

<pallas_src>
import jax
import jax.numpy as jnp
from jax import lax
from jax.experimental import pallas as pl
from jax.experimental.pallas import tpu as pltpu

EPS = 1e-5


def _round_up(x, m):
    return (x + m - 1) // m * m


def _vmem_capacity_bytes():
    try:
        return int(pltpu.get_tpu_info().vmem_capacity_bytes)
    except Exception:
        return 64 << 20  # assume the most restrictive generation (v7x: 64 MiB / TensorCore)


def _compiler_params(n_grid_axes=1):
    kwargs = dict(dimension_semantics=("parallel",) * n_grid_axes)
    cap = _vmem_capacity_bytes()
    kwargs["vmem_limit_bytes"] = int(min(cap // 2, 64 << 20))
    return pltpu.CompilerParams(**kwargs)


def _choose_th(H, W, Cin, Cp, budget):
    """Largest multiple-of-8 row tile whose (double-buffered) pass-1 blocks fit `budget`."""
    Wp = W + 2
    H8 = _round_up(max(H, 1), 8)

    def need(th):
        x_blk = (th + 3) * Wp * Cin * 2        # bf16 halo'd input block
        y_blk = th * Wp * Cp * 2               # bf16 conv-output block
        st_blk = 8 * Cp * 4                    # f32 stats block
        w_res = 9 * Cin * Cp * 2               # resident bf16 weight
        acc = th * Wp * Cp * 4                 # f32 accumulator value
        return 2 * (x_blk + y_blk + st_blk) + 2 * w_res + acc

    th = 8
    while th + 8 <= min(H8, 512) and need(th + 8) <= budget:
        th += 8
    return min(th, H8)


def _choose_pass2_rows(G, rows_per_block, Cp, budget, target_rows=4096):
    """Pass-2 row tile: a multiple of pass-1's rows_per_block that divides the total rows."""
    max_by_vmem = max(1, budget // (2 * rows_per_block * Cp * (2 + 4)))
    max_f = max(1, min(target_rows // max(rows_per_block, 1), max_by_vmem))
    f = 1
    for d in range(1, G + 1):
        if G % d == 0 and d <= max_f:
            f = d
    return rows_per_block * f, G // f


def conv_bn_forward_nhwc(x_nhwc, weight_oihw, gamma, beta, ks=3, padding=1, th=None):
    """3x3 / stride-1 / pad-1 conv (no bias) + training-mode BatchNorm.  NHWC in / NHWC out.

    x_nhwc: (N, H, W, Cin);  weight_oihw: (Cout, Cin, kh, kw)  [PyTorch weight layout].
    """
    assert ks == 3 and padding == 1, "specialised to the module's 3x3 / stride-1 / pad-1 conv"
    N, H, W, Cin = x_nhwc.shape
    Cout = weight_oihw.shape[0]
    M = N * H * W                                    # true element count for the BN stats

    # Lane-dense output channels (128 suits v5e; use 256 for wide layers on v6e/v7x MXUs).
    Cp = _round_up(Cout, 256 if Cout > 128 else 128)
    # TODO(synk): for Cout << 128 (e.g. this toy Cout=8) most MXU columns / y bytes are
    # padding; batch several small-Cout layers along Cp or fall back to XLA conv there.

    budget = _vmem_capacity_bytes() // 4             # headroom for compiler scratch
    if th is None:
        th = _choose_th(H, W, Cin, Cp, budget)
    th = min(max(8, _round_up(th, 8)), _round_up(H, 8))

    nHB = -(-H // th)                                # row blocks per image
    H_pad = nHB * th
    G = N * nHB                                      # pass-1 grid size
    Wp = W + 2                                       # padded width (also extended-output width)
    R_in = (th + 3) * Wp                             # input rows per block (flattened h*w)
    R_out = th * Wp                                  # output rows per block (cols W..W+1 garbage)

    # ---- wrapper glue (bf16, ~1x input bytes): conv zero-pad + halo'd row blocks ----------
    xb = x_nhwc.astype(jnp.bfloat16)
    # top pad 1, bottom pad H_pad-H+2 (halo + wrap slack), width pad 1 each side.
    xp = jnp.pad(xb, ((0, 0), (1, H_pad - H + 2), (1, 1), (0, 0)))   # (N, H_pad+3, Wp, Cin)
    x_halo = jnp.stack([xp[:, hb * th: hb * th + th + 3] for hb in range(nHB)], axis=1)
    x2 = x_halo.reshape(G, R_in, Cin)                                # free dim-collapse

    # weight (Cout, Cin, 3, 3) -> (3, 3, Cin, Cout) -> (9, Cin, Cp) bf16
    w_taps = jnp.transpose(weight_oihw, (2, 3, 1, 0)).reshape(ks * ks, Cin, Cout)
    w_taps = jnp.pad(w_taps.astype(jnp.float32), ((0, 0), (0, 0), (0, Cp - Cout)))
    w_taps = w_taps.astype(jnp.bfloat16)

    # ---- pass 1: conv as 9 shifted MXU matmuls + per-tile partial BN statistics ----------
    def conv_stats_kernel(x_ref, w_ref, y_ref, stats_ref):
        acc = jnp.zeros((R_out, Cp), jnp.float32)
        for dy in range(ks):
            for dx in range(ks):
                start = dy * Wp + dx                                  # static tap offset
                lhs = x_ref[0, start:start + R_out, :]                # (R_out, Cin) bf16
                acc = acc + jnp.dot(lhs, w_ref[dy * ks + dx],
                                    preferred_element_type=jnp.float32)   # MXU, f32 acc
        # Zero the wrap/garbage width columns (and H-padding rows, if any) so the BN
        # statistics stay globally exact; these positions are dropped by the wrapper.
        pos = lax.broadcasted_iota(jnp.int32, (R_out, 1), 0)
        valid = (pos % Wp) < W
        if H_pad != H:
            hb = lax.rem(pl.program_id(0), jnp.int32(nHB))
            valid = jnp.logical_and(valid, hb * th + pos // Wp < H)
        acc = jnp.where(valid, acc, 0.0)
        stats_ref[0:1, :] = jnp.sum(acc, axis=0, keepdims=True)       # per-channel sum
        stats_ref[1:2, :] = jnp.sum(acc * acc, axis=0, keepdims=True) # per-channel sum of squares
        # rows 2..7 of the stats block are never read by the wrapper -> left unwritten
        y_ref[...] = acc.astype(y_ref.dtype)                          # bf16 writeback

    y, stats = pl.pallas_call(
        conv_stats_kernel,
        out_shape=(jax.ShapeDtypeStruct((G * R_out, Cp), jnp.bfloat16),
                   jax.ShapeDtypeStruct((G * 8, Cp), jnp.float32)),
        grid=(G,),
        in_specs=[pl.BlockSpec((1, R_in, Cin), lambda i: (i, 0, 0)),      # halo'd row block
                  pl.BlockSpec((ks * ks, Cin, Cp), lambda i: (0, 0, 0))],  # resident weight
        out_specs=[pl.BlockSpec((R_out, Cp), lambda i: (i, 0)),
                   pl.BlockSpec((8, Cp), lambda i: (i, 0))],
        compiler_params=_compiler_params(1),
    )(x2, w_taps)

    # ---- exact global BN statistics (training mode, biased variance), once per channel ---
    stats = stats.reshape(G, 8, Cp)
    s1 = jnp.sum(stats[:, 0, :], axis=0)             # padded rows / channels contribute 0
    s2 = jnp.sum(stats[:, 1, :], axis=0)
    mean = s1 / M                                     # divide by the TRUE element count
    var = jnp.maximum(s2 / M - mean * mean, 0.0)
    inv_std = lax.rsqrt(var + EPS)
    gamma_p = jnp.pad(gamma.astype(jnp.float32), (0, Cp - Cout))
    beta_p = jnp.pad(beta.astype(jnp.float32), (0, Cp - Cout))
    scale = (gamma_p * inv_std).reshape(1, Cp)
    shift = (beta_p - mean * gamma_p * inv_std).reshape(1, Cp)

    # ---- pass 2: lane-dense FMA over larger, independent row tiles -------------------------
    rows2, grid2 = _choose_pass2_rows(G, R_out, Cp, budget)

    def bn_apply_kernel(y_ref, scale_ref, shift_ref, o_ref):
        o_ref[...] = y_ref[...].astype(jnp.float32) * scale_ref[...] + shift_ref[...]

    out_flat = pl.pallas_call(
        bn_apply_kernel,
        out_shape=jax.ShapeDtypeStruct((G * R_out, Cp), jnp.float32),
        grid=(grid2,),
        in_specs=[pl.BlockSpec((rows2, Cp), lambda i: (i, 0)),
                  pl.BlockSpec((1, Cp), lambda i: (0, 0)),
                  pl.BlockSpec((1, Cp), lambda i: (0, 0))],
        out_specs=pl.BlockSpec((rows2, Cp), lambda i: (i, 0)),
        compiler_params=_compiler_params(1),
    )(y, scale, shift)

    # drop channel / width / height padding; rows are ordered (N, H_pad, Wp)
    out = out_flat[:, :Cout].reshape(N, H_pad, Wp, Cout)[:, :H, :W, :]
    return out


def conv_bn_relu_forward(x_nchw, weight, gamma, beta, ks=3, padding=1, th=None):
    """PyTorch-layout adapter (NCHW in / NCHW out) matching the module's forward.
    Callers that already hold NHWC activations should call conv_bn_forward_nhwc directly
    and skip both boundary transposes."""
    x_nhwc = jnp.transpose(x_nchw, (0, 2, 3, 1))
    out = conv_bn_forward_nhwc(x_nhwc, weight, gamma, beta, ks=ks, padding=padding, th=th)
    return jnp.transpose(out, (0, 3, 1, 2))


def reference_forward(x_nchw, weight, gamma, beta):
    # pure-JAX f32 reference: conv via lax + training-mode (biased) BatchNorm.
    y = lax.conv_general_dilated(
        x_nchw.astype(jnp.float32), weight.astype(jnp.float32),
        window_strides=(1, 1), padding=((1, 1), (1, 1)),
        dimension_numbers=("NCHW", "OIHW", "NCHW"))
    mean = jnp.mean(y, axis=(0, 2, 3), keepdims=True)
    var = jnp.mean((y - mean) ** 2, axis=(0, 2, 3), keepdims=True)
    y_hat = (y - mean) * lax.rsqrt(var + EPS)
    return y_hat * gamma.reshape(1, -1, 1, 1) + beta.reshape(1, -1, 1, 1)


if __name__ == "__main__":
    key = jax.random.PRNGKey(0)
    k_x, k_w = jax.random.split(key)

    N, Cin, H, W = 2, 4, 16, 16
    Cout, ks = 8, 3

    # Pre-round inputs to bf16-representable f32 values so the f32 reference checks the
    # kernel (bf16 MXU operands, f32 accumulation) tightly on the matmul path.
    x = jax.random.normal(k_x, (N, Cin, H, W), dtype=jnp.float32)
    x = x.astype(jnp.bfloat16).astype(jnp.float32)

    # kaiming_normal_(a=1): gain = sqrt(2/(1+1^2)) = 1, std = 1/sqrt(fan_in), fan_in = Cin*ks*ks
    fan_in = Cin * ks * ks
    weight = jax.random.normal(k_w, (Cout, Cin, ks, ks), dtype=jnp.float32) / jnp.sqrt(
        jnp.float32(fan_in))
    weight = weight.astype(jnp.bfloat16).astype(jnp.float32)
    gamma = jnp.ones((Cout,), dtype=jnp.float32)   # BatchNorm2d affine weight init
    beta = jnp.zeros((Cout,), dtype=jnp.float32)   # BatchNorm2d affine bias init

    # th=8 so the toy shape (H=16) exercises the multi-block grid and the cross-tile
    # BN-statistics combine; production shapes auto-size th from the chip's VMEM budget.
    out = conv_bn_relu_forward(x, weight, gamma, beta, ks=ks, padding=1, th=8)
    out = jax.block_until_ready(out)
    assert out.shape == (N, Cout, H, W)

    ref = jax.block_until_ready(reference_forward(x, weight, gamma, beta))
    # Tolerance 1e-2 reflects the bf16 storage of the conv intermediate y (<= ~0.4%
    # relative quantization); the conv itself and the tiled BN statistics are exact f32.
    assert jnp.allclose(out, ref, rtol=1e-2, atol=1e-2), "mismatch vs reference"

    print("KERNEL_OK")
</pallas_src>

<mosaic_0001>
module attributes {stable_mosaic.version = 11 : i64} {
  func.func @conv_stats_kernel(%arg0: i32, %arg1: memref<1x198x4xbf16, #tpu.memory_space<vmem>>, %arg2: memref<9x4x128xbf16, #tpu.memory_space<vmem>>, %arg3: memref<144x128xbf16, #tpu.memory_space<vmem>>, %arg4: memref<8x128xf32, #tpu.memory_space<vmem>>) attributes {dimension_semantics = [#tpu.dimension_semantics<parallel>], iteration_bounds = array<i64: 4>, scalar_prefetch = 0 : i64, scratch_operands = 0 : i64, tpu.core_type = #tpu.core_type<tc>, window_params = [{transform_indices = @transform_0, window_bounds = array<i64: 1, 198, 4>}, {pipeline_mode = #tpu.pipeline_mode<synchronous>, transform_indices = @transform_1, window_bounds = array<i64: 9, 4, 128>}, {transform_indices = @transform_2, window_bounds = array<i64: 144, 128>}, {transform_indices = @transform_3, window_bounds = array<i64: 8, 128>}]} {
    %cst = arith.constant 0.000000e+00 : f32
    %0 = vector.broadcast %cst : f32 to vector<144x128xf32>
    %c0 = arith.constant 0 : index
    %c0_0 = arith.constant 0 : index
    %c0_1 = arith.constant 0 : index
    %1 = vector.load %arg1[%c0, %c0_0, %c0_1] : memref<1x198x4xbf16, #tpu.memory_space<vmem>>, vector<1x144x4xbf16>
    %2 = vector.shape_cast %1 : vector<1x144x4xbf16> to vector<144x4xbf16>
    %c0_2 = arith.constant 0 : index
    %c0_3 = arith.constant 0 : index
    %c0_4 = arith.constant 0 : index
    %3 = vector.load %arg2[%c0_2, %c0_3, %c0_4] : memref<9x4x128xbf16, #tpu.memory_space<vmem>>, vector<1x4x128xbf16>
    %4 = vector.shape_cast %3 : vector<1x4x128xbf16> to vector<4x128xbf16>
    %cst_5 = arith.constant dense<0.000000e+00> : vector<144x128xf32>
    %5 = tpu.matmul %2, %4, %cst_5 {dimension_numbers = #tpu.dot_dimension_numbers<[1], [0], [0], [1], [0, 0, 1, 1], [], []>} : vector<144x4xbf16>, vector<4x128xbf16>, vector<144x128xf32> -> vector<144x128xf32>
    %6 = arith.addf %0, %5 : vector<144x128xf32>
    %c0_6 = arith.constant 0 : index
    %c1 = arith.constant 1 : index
    %c0_7 = arith.constant 0 : index
    %7 = vector.load %arg1[%c0_6, %c1, %c0_7] : memref<1x198x4xbf16, #tpu.memory_space<vmem>>, vector<1x144x4xbf16>
    %8 = vector.shape_cast %7 : vector<1x144x4xbf16> to vector<144x4xbf16>
    %c1_8 = arith.constant 1 : index
    %c0_9 = arith.constant 0 : index
    %c0_10 = arith.constant 0 : index
    %9 = vector.load %arg2[%c1_8, %c0_9, %c0_10] : memref<9x4x128xbf16, #tpu.memory_space<vmem>>, vector<1x4x128xbf16>
    %10 = vector.shape_cast %9 : vector<1x4x128xbf16> to vector<4x128xbf16>
    %cst_11 = arith.constant dense<0.000000e+00> : vector<144x128xf32>
    %11 = tpu.matmul %8, %10, %cst_11 {dimension_numbers = #tpu.dot_dimension_numbers<[1], [0], [0], [1], [0, 0, 1, 1], [], []>} : vector<144x4xbf16>, vector<4x128xbf16>, vector<144x128xf32> -> vector<144x128xf32>
    %12 = arith.addf %6, %11 : vector<144x128xf32>
    %c0_12 = arith.constant 0 : index
    %c2 = arith.constant 2 : index
    %c0_13 = arith.constant 0 : index
    %13 = vector.load %arg1[%c0_12, %c2, %c0_13] : memref<1x198x4xbf16, #tpu.memory_space<vmem>>, vector<1x144x4xbf16>
    %14 = vector.shape_cast %13 : vector<1x144x4xbf16> to vector<144x4xbf16>
    %c2_14 = arith.constant 2 : index
    %c0_15 = arith.constant 0 : index
    %c0_16 = arith.constant 0 : index
    %15 = vector.load %arg2[%c2_14, %c0_15, %c0_16] : memref<9x4x128xbf16, #tpu.memory_space<vmem>>, vector<1x4x128xbf16>
    %16 = vector.shape_cast %15 : vector<1x4x128xbf16> to vector<4x128xbf16>
    %cst_17 = arith.constant dense<0.000000e+00> : vector<144x128xf32>
    %17 = tpu.matmul %14, %16, %cst_17 {dimension_numbers = #tpu.dot_dimension_numbers<[1], [0], [0], [1], [0, 0, 1, 1], [], []>} : vector<144x4xbf16>, vector<4x128xbf16>, vector<144x128xf32> -> vector<144x128xf32>
    %18 = arith.addf %12, %17 : vector<144x128xf32>
    %c0_18 = arith.constant 0 : index
    %c18 = arith.constant 18 : index
    %c0_19 = arith.constant 0 : index
    %19 = vector.load %arg1[%c0_18, %c18, %c0_19] : memref<1x198x4xbf16, #tpu.memory_space<vmem>>, vector<1x144x4xbf16>
    %20 = vector.shape_cast %19 : vector<1x144x4xbf16> to vector<144x4xbf16>
    %c3 = arith.constant 3 : index
    %c0_20 = arith.constant 0 : index
    %c0_21 = arith.constant 0 : index
    %21 = vector.load %arg2[%c3, %c0_20, %c0_21] : memref<9x4x128xbf16, #tpu.memory_space<vmem>>, vector<1x4x128xbf16>
    %22 = vector.shape_cast %21 : vector<1x4x128xbf16> to vector<4x128xbf16>
    %cst_22 = arith.constant dense<0.000000e+00> : vector<144x128xf32>
    %23 = tpu.matmul %20, %22, %cst_22 {dimension_numbers = #tpu.dot_dimension_numbers<[1], [0], [0], [1], [0, 0, 1, 1], [], []>} : vector<144x4xbf16>, vector<4x128xbf16>, vector<144x128xf32> -> vector<144x128xf32>
    %24 = arith.addf %18, %23 : vector<144x128xf32>
    %c0_23 = arith.constant 0 : index
    %c19 = arith.constant 19 : index
    %c0_24 = arith.constant 0 : index
    %25 = vector.load %arg1[%c0_23, %c19, %c0_24] : memref<1x198x4xbf16, #tpu.memory_space<vmem>>, vector<1x144x4xbf16>
    %26 = vector.shape_cast %25 : vector<1x144x4xbf16> to vector<144x4xbf16>
    %c4 = arith.constant 4 : index
    %c0_25 = arith.constant 0 : index
    %c0_26 = arith.constant 0 : index
    %27 = vector.load %arg2[%c4, %c0_25, %c0_26] : memref<9x4x128xbf16, #tpu.memory_space<vmem>>, vector<1x4x128xbf16>
    %28 = vector.shape_cast %27 : vector<1x4x128xbf16> to vector<4x128xbf16>
    %cst_27 = arith.constant dense<0.000000e+00> : vector<144x128xf32>
    %29 = tpu.matmul %26, %28, %cst_27 {dimension_numbers = #tpu.dot_dimension_numbers<[1], [0], [0], [1], [0, 0, 1, 1], [], []>} : vector<144x4xbf16>, vector<4x128xbf16>, vector<144x128xf32> -> vector<144x128xf32>
    %30 = arith.addf %24, %29 : vector<144x128xf32>
    %c0_28 = arith.constant 0 : index
    %c20 = arith.constant 20 : index
    %c0_29 = arith.constant 0 : index
    %31 = vector.load %arg1[%c0_28, %c20, %c0_29] : memref<1x198x4xbf16, #tpu.memory_space<vmem>>, vector<1x144x4xbf16>
    %32 = vector.shape_cast %31 : vector<1x144x4xbf16> to vector<144x4xbf16>
    %c5 = arith.constant 5 : index
    %c0_30 = arith.constant 0 : index
    %c0_31 = arith.constant 0 : index
    %33 = vector.load %arg2[%c5, %c0_30, %c0_31] : memref<9x4x128xbf16, #tpu.memory_space<vmem>>, vector<1x4x128xbf16>
    %34 = vector.shape_cast %33 : vector<1x4x128xbf16> to vector<4x128xbf16>
    %cst_32 = arith.constant dense<0.000000e+00> : vector<144x128xf32>
    %35 = tpu.matmul %32, %34, %cst_32 {dimension_numbers = #tpu.dot_dimension_numbers<[1], [0], [0], [1], [0, 0, 1, 1], [], []>} : vector<144x4xbf16>, vector<4x128xbf16>, vector<144x128xf32> -> vector<144x128xf32>
    %36 = arith.addf %30, %35 : vector<144x128xf32>
    %c0_33 = arith.constant 0 : index
    %c36 = arith.constant 36 : index
    %c0_34 = arith.constant 0 : index
    %37 = vector.load %arg1[%c0_33, %c36, %c0_34] : memref<1x198x4xbf16, #tpu.memory_space<vmem>>, vector<1x144x4xbf16>
    %38 = vector.shape_cast %37 : vector<1x144x4xbf16> to vector<144x4xbf16>
    %c6 = arith.constant 6 : index
    %c0_35 = arith.constant 0 : index
    %c0_36 = arith.constant 0 : index
    %39 = vector.load %arg2[%c6, %c0_35, %c0_36] : memref<9x4x128xbf16, #tpu.memory_space<vmem>>, vector<1x4x128xbf16>
    %40 = vector.shape_cast %39 : vector<1x4x128xbf16> to vector<4x128xbf16>
    %cst_37 = arith.constant dense<0.000000e+00> : vector<144x128xf32>
    %41 = tpu.matmul %38, %40, %cst_37 {dimension_numbers = #tpu.dot_dimension_numbers<[1], [0], [0], [1], [0, 0, 1, 1], [], []>} : vector<144x4xbf16>, vector<4x128xbf16>, vector<144x128xf32> -> vector<144x128xf32>
    %42 = arith.addf %36, %41 : vector<144x128xf32>
    %c0_38 = arith.constant 0 : index
    %c37 = arith.constant 37 : index
    %c0_39 = arith.constant 0 : index
    %43 = vector.load %arg1[%c0_38, %c37, %c0_39] : memref<1x198x4xbf16, #tpu.memory_space<vmem>>, vector<1x144x4xbf16>
    %44 = vector.shape_cast %43 : vector<1x144x4xbf16> to vector<144x4xbf16>
    %c7 = arith.constant 7 : index
    %c0_40 = arith.constant 0 : index
    %c0_41 = arith.constant 0 : index
    %45 = vector.load %arg2[%c7, %c0_40, %c0_41] : memref<9x4x128xbf16, #tpu.memory_space<vmem>>, vector<1x4x128xbf16>
    %46 = vector.shape_cast %45 : vector<1x4x128xbf16> to vector<4x128xbf16>
    %cst_42 = arith.constant dense<0.000000e+00> : vector<144x128xf32>
    %47 = tpu.matmul %44, %46, %cst_42 {dimension_numbers = #tpu.dot_dimension_numbers<[1], [0], [0], [1], [0, 0, 1, 1], [], []>} : vector<144x4xbf16>, vector<4x128xbf16>, vector<144x128xf32> -> vector<144x128xf32>
    %48 = arith.addf %42, %47 : vector<144x128xf32>
    %c0_43 = arith.constant 0 : index
    %c38 = arith.constant 38 : index
    %c0_44 = arith.constant 0 : index
    %49 = vector.load %arg1[%c0_43, %c38, %c0_44] : memref<1x198x4xbf16, #tpu.memory_space<vmem>>, vector<1x144x4xbf16>
    %50 = vector.shape_cast %49 : vector<1x144x4xbf16> to vector<144x4xbf16>
    %c8 = arith.constant 8 : index
    %c0_45 = arith.constant 0 : index
    %c0_46 = arith.constant 0 : index
    %51 = vector.load %arg2[%c8, %c0_45, %c0_46] : memref<9x4x128xbf16, #tpu.memory_space<vmem>>, vector<1x4x128xbf16>
    %52 = vector.shape_cast %51 : vector<1x4x128xbf16> to vector<4x128xbf16>
    %cst_47 = arith.constant dense<0.000000e+00> : vector<144x128xf32>
    %53 = tpu.matmul %50, %52, %cst_47 {dimension_numbers = #tpu.dot_dimension_numbers<[1], [0], [0], [1], [0, 0, 1, 1], [], []>} : vector<144x4xbf16>, vector<4x128xbf16>, vector<144x128xf32> -> vector<144x128xf32>
    %54 = arith.addf %48, %53 : vector<144x128xf32>
    %55 = tpu.iota {dimensions = array<i32: 0>} : vector<144x1xi32>
    %c18_i32 = arith.constant 18 : i32
    %c0_i32 = arith.constant 0 : i32
    %56 = arith.cmpi eq, %c18_i32, %c0_i32 : i32
    %c1_i32 = arith.constant 1 : i32
    %57 = arith.select %56, %c1_i32, %c18_i32 : i32
    %58 = vector.broadcast %57 : i32 to vector<144x1xi32>
    %59 = arith.remsi %55, %58 : vector<144x1xi32>
    %c0_i32_48 = arith.constant 0 : i32
    %60 = vector.broadcast %c0_i32_48 : i32 to vector<144x1xi32>
    %61 = arith.cmpi ne, %59, %60 : vector<144x1xi32>
    %c0_i32_49 = arith.constant 0 : i32
    %62 = vector.broadcast %c0_i32_49 : i32 to vector<144x1xi32>
    %63 = arith.cmpi slt, %59, %62 : vector<144x1xi32>
    %c0_i32_50 = arith.constant 0 : i32
    %64 = arith.cmpi slt, %57, %c0_i32_50 : i32
    %65 = vector.broadcast %64 : i1 to vector<144x1xi1>
    %66 = vector.broadcast %65 : vector<144x1xi1> to vector<144x1xi1>
    %67 = arith.xori %63, %66 : vector<144x1xi1>
    %68 = arith.andi %67, %61 : vector<144x1xi1>
    %69 = vector.broadcast %57 : i32 to vector<144x1xi32>
    %70 = arith.addi %59, %69 : vector<144x1xi32>
    %71 = arith.select %68, %70, %59 : vector<144x1xi1>, vector<144x1xi32>
    %c16_i32 = arith.constant 16 : i32
    %72 = vector.broadcast %c16_i32 : i32 to vector<144x1xi32>
    %73 = arith.cmpi slt, %71, %72 : vector<144x1xi32>
    %cst_51 = arith.constant 0.000000e+00 : f32
    %74 = vector.shape_cast %73 : vector<144x1xi1> to vector<144x1xi1>
    %75 = vector.broadcast %74 : vector<144x1xi1> to vector<144x128xi1>
    %76 = vector.broadcast %cst_51 : f32 to vector<144x128xf32>
    %77 = arith.select %75, %54, %76 : vector<144x128xi1>, vector<144x128xf32>
    %cst_52 = arith.constant dense<0.000000e+00> : vector<128xf32>
    %78 = vector.multi_reduction <add>, %77, %cst_52 [0] : vector<144x128xf32> to vector<128xf32>
    %79 = vector.shape_cast %78 : vector<128xf32> to vector<1x128xf32>
    %c0_53 = arith.constant 0 : index
    %c0_54 = arith.constant 0 : index
    %80 = vector.load %arg4[%c0_53, %c0_54] : memref<8x128xf32, #tpu.memory_space<vmem>>, vector<1x128xf32>
    tpu.vector_store %arg4[%c0_53, %c0_54], %79 {strides = array<i32>} : memref<8x128xf32, #tpu.memory_space<vmem>>, vector<1x128xf32>,
    %81 = arith.mulf %77, %77 : vector<144x128xf32>
    %cst_55 = arith.constant dense<0.000000e+00> : vector<128xf32>
    %82 = vector.multi_reduction <add>, %81, %cst_55 [0] : vector<144x128xf32> to vector<128xf32>
    %83 = vector.shape_cast %82 : vector<128xf32> to vector<1x128xf32>
    %c1_56 = arith.constant 1 : index
    %c0_57 = arith.constant 0 : index
    %84 = vector.load %arg4[%c1_56, %c0_57] : memref<8x128xf32, #tpu.memory_space<vmem>>, vector<1x128xf32>
    tpu.vector_store %arg4[%c1_56, %c0_57], %83 {strides = array<i32>} : memref<8x128xf32, #tpu.memory_space<vmem>>, vector<1x128xf32>,
    %85 = arith.truncf %77 : vector<144x128xf32> to vector<144x128xbf16>
    %c0_58 = arith.constant 0 : index
    %c0_59 = arith.constant 0 : index
    %86 = vector.load %arg3[%c0_58, %c0_59] : memref<144x128xbf16, #tpu.memory_space<vmem>>, vector<144x128xbf16>
    tpu.vector_store %arg3[%c0_58, %c0_59], %85 {strides = array<i32>} : memref<144x128xbf16, #tpu.memory_space<vmem>>, vector<144x128xbf16>,
    return
  }
  func.func @transform_0(%arg0: i32) -> (i32, i32, i32) {
    %c0_i32 = arith.constant 0 : i32
    %c0_i32_0 = arith.constant 0 : i32
    %c0_i32_1 = arith.constant 0 : i32
    return %arg0, %c0_i32, %c0_i32_0 : i32, i32, i32
  }
  func.func @transform_1(%arg0: i32) -> (i32, i32, i32) {
    %c0_i32 = arith.constant 0 : i32
    %c0_i32_0 = arith.constant 0 : i32
    %c0_i32_1 = arith.constant 0 : i32
    %c0_i32_2 = arith.constant 0 : i32
    return %c0_i32, %c0_i32_0, %c0_i32_1 : i32, i32, i32
  }
  func.func @transform_2(%arg0: i32) -> (i32, i32) {
    %c0_i32 = arith.constant 0 : i32
    %c0_i32_0 = arith.constant 0 : i32
    return %arg0, %c0_i32 : i32, i32
  }
  func.func @transform_3(%arg0: i32) -> (i32, i32) {
    %c0_i32 = arith.constant 0 : i32
    %c0_i32_0 = arith.constant 0 : i32
    return %arg0, %c0_i32 : i32, i32
  }
}

</mosaic_0001>

<llo_original>
// kernel: tpu_custom_call.1
$region0: #{tpu_custom_call.1}
  #allocation0 [shape = 'u32[]', space=smem, size = 0x4, offset = 0x4, fixed_abs, tag = 'smem constant byte address 0x4 - core index']
  #allocation1 [shape = 'u32[144,128]{1,0:T(1,128)}', space=vmem, size = 0x12000, scoped, tag = 'internal scratch']
  %s0 = inlined_call_operand.vmem [shape: bf16[4,198,4], index: 0, kind: input, shape index: {}]
  %s1 = inlined_call_operand.vmem [shape: bf16[9,4,128], index: 1, kind: input, shape index: {}]
  %s2 = inlined_call_operand.hbm [shape: bf16[576,128], index: 2, kind: output, shape index: {0}]
  %s3 = inlined_call_operand.hbm [shape: f32[32,128], index: 3, kind: output, shape index: {1}]
  %4 = xla_tuple %s2, %s3
  %s5 = sld [smem:[#allocation0]]
  $region49: #{tpu_custom_call.1} parent=0
    _
  %s7 = ssub.s32 1, %s5
  %s8 = scalar_select 0, %s7, %s5
  $region1: #{tpu_custom_call.1} parent=0
    #allocation2 [shape = 'u8[73728]{0}', space=vmem, size = 0x12000, scoped, tag = 'output window, operand 0']
    #allocation3 [shape = 's32[2]{0}', space=sflag, size = 0x8, scoped, tag = 'scoped memory for tpu_custom_call.1']
    #allocation4 [shape = 'u8[8192]{0}', space=vmem, size = 0x2000, scoped, tag = 'output window, operand 1']
    #allocation5 [shape = 's32[2]{0}', space=sflag, size = 0x8, scoped, tag = 'scoped memory for tpu_custom_call.1']
    %9 = vsyncpa [#allocation3], 0
    %s10 = scalar_lea.sflag [#allocation3], 1
    %11 = vsyncpa %s10, 0
    %12 = vsyncpa [#allocation5], 0
    %s13 = scalar_lea.sflag [#allocation5], 1
    %14 = vsyncpa %s13, 0
    loop: start=0, step=1, limit=6
    $region2: #{tpu_custom_call.1} parent=1 // loop_pre_header
      _
    $region3: #{tpu_custom_call.1} parent=1 // loop_header
      %s16 = sphi 0, %s20
      %p17 = scmp.ge.s32.totalorder %s16, 6
      %s26 = sphi 0, %s28
      %s29 = sphi 0, %s26
      %s30 = sphi 0, %s29
      %s46 = sphi 0, %s30
      %s50 = sphi 0, %s50
      %s52 = sphi 0, %s50
      %s53 = sphi 0, %s52
      %s67 = sphi 0, %s53
      %s73 = sphi 0, %s75
      %s76 = sphi 0, %s73
      %s77 = sphi 0, %s76
      %s93 = sphi 0, %s77
      %s99 = sphi 0, %s101
      %s102 = sphi 0, %s99
      %s103 = sphi 0, %s102
      %s119 = sphi 0, %s103
    $region4: #{tpu_custom_call.1} parent=1 // loop_header_branch
      %19 = sbr.rel (%p17) target = $region8
    $region5: #{tpu_custom_call.1} parent=1 // loop_body
      %s21 = ssub.s32 %s16, 1
      %s22 = ssub.s32 %s16, 2
      %s23 = sadd.s32 %s16, 1
      %s24 = ssub.s32 %s16, %s23
      %p25 = scmp.eq.s32.totalorder %s24, 0
      %s27 = sadd.s32 %s26, 1
      %s28 = scalar_select %p25, %s26, %s27
      %p31 = pneg %p25
      %p32 = scmp.eq.s32.totalorder %s16, 3
      %p33 = por %p31, %p32
      %p34 = scmp.ne.s32.totalorder %s26, %s29
      %p35 = scmp.eq.s32.totalorder %s16, 0
      %p36 = por %p34, %p35
      %p37 = scmp.ne.s32.totalorder %s26, %s29
      %p38 = scmp.eq.s32.totalorder %s21, 3
      %p39 = por %p37, %p38
      %p40 = scmp.ne.s32.totalorder %s29, %s30
      %p41 = scmp.eq.s32.totalorder %s21, 0
      %p42 = por %p40, %p41
      %p43 = scmp.ne.s32.totalorder %s29, %s30
      %p44 = scmp.eq.s32.totalorder %s22, 3
      %p45 = por %p43, %p44
      %p47 = scmp.ne.s32.totalorder %s30, %s46
      %p48 = scmp.eq.s32.totalorder %s22, 0
      %p49 = por %p47, %p48
      %s51 = sadd.s32 %s50, 1
      %p54 = scmp.eq.s32.totalorder %s16, 3
      %p55 = scmp.ne.s32.totalorder %s50, %s52
      %p56 = scmp.eq.s32.totalorder %s16, 0
      %p57 = por %p55, %p56
      %p58 = scmp.ne.s32.totalorder %s50, %s52
      %p59 = scmp.eq.s32.totalorder %s21, 3
      %p60 = por %p58, %p59
      %p61 = scmp.ne.s32.totalorder %s52, %s53
      %p62 = scmp.eq.s32.totalorder %s21, 0
      %p63 = por %p61, %p62
      %p64 = scmp.ne.s32.totalorder %s52, %s53
      %p65 = scmp.eq.s32.totalorder %s22, 3
      %p66 = por %p64, %p65
      %p68 = scmp.ne.s32.totalorder %s53, %s67
      %p69 = scmp.eq.s32.totalorder %s22, 0
      %p70 = por %p68, %p69
      %s71 = ssub.s32 %s16, %s23
      %p72 = scmp.eq.s32.totalorder %s71, 0
      %s74 = sadd.s32 %s73, 1
      %s75 = scalar_select %p72, %s73, %s74
      %p78 = pneg %p72
      %p79 = scmp.eq.s32.totalorder %s16, 3
      %p80 = por %p78, %p79
      %p81 = scmp.ne.s32.totalorder %s73, %s76
      %p82 = scmp.eq.s32.totalorder %s16, 0
      %p83 = por %p81, %p82
      %p84 = scmp.ne.s32.totalorder %s73, %s76
      %p85 = scmp.eq.s32.totalorder %s21, 3
      %p86 = por %p84, %p85
      %p87 = scmp.ne.s32.totalorder %s76, %s77
      %p88 = scmp.eq.s32.totalorder %s21, 0
      %p89 = por %p87, %p88
      %p90 = scmp.ne.s32.totalorder %s76, %s77
      %p91 = scmp.eq.s32.totalorder %s22, 3
      %p92 = por %p90, %p91
      %p94 = scmp.ne.s32.totalorder %s77, %s93
      %p95 = scmp.eq.s32.totalorder %s22, 0
      %p96 = por %p94, %p95
      %s97 = ssub.s32 %s16, %s23
      %p98 = scmp.eq.s32.totalorder %s97, 0
      %s100 = sadd.s32 %s99, 1
      %s101 = scalar_select %p98, %s99, %s100
      %p104 = pneg %p98
      %p105 = scmp.eq.s32.totalorder %s16, 3
      %p106 = por %p104, %p105
      %p107 = scmp.ne.s32.totalorder %s99, %s102
      %p108 = scmp.eq.s32.totalorder %s16, 0
      %p109 = por %p107, %p108
      %p110 = scmp.ne.s32.totalorder %s99, %s102
      %p111 = scmp.eq.s32.totalorder %s21, 3
      %p112 = por %p110, %p111
      %p113 = scmp.ne.s32.totalorder %s102, %s103
      %p114 = scmp.eq.s32.totalorder %s21, 0
      %p115 = por %p113, %p114
      %p116 = scmp.ne.s32.totalorder %s102, %s103
      %p117 = scmp.eq.s32.totalorder %s22, 3
      %p118 = por %p116, %p117
      %p120 = scmp.ne.s32.totalorder %s103, %s119
      %p121 = scmp.eq.s32.totalorder %s22, 0
      %p122 = por %p120, %p121
      %p123 = scmp.le.s32.totalorder 1, %s16
      %p124 = scmp.lt.s32.totalorder %s16, 5
      %p125 = pnand %p123, %p124
      %p126 = pneg %p125
      // Predicated region
      $region9: #{tpu_custom_call.1} parent=5 // pred_check
        _
      $region10: #{tpu_custom_call.1} parent=5 // pred_check_branch
        %128 = sbr.rel (%p125) target = $region12
      $region11: #{tpu_custom_call.1} parent=5 // pred_region
        %s129 = ssub.s32 %s16, 1
        // Predicated region
        $region13: #{tpu_custom_call.1} parent=11 // pred_check
          %p130 = pneg %p63
        $region14: #{tpu_custom_call.1} parent=11 // pred_check_branch
          %132 = sbr.rel (%p130) target = $region16
        $region15: #{tpu_custom_call.1} parent=11 // pred_region
          _
        $region16: #{tpu_custom_call.1} parent=11 // pred_fallthru
          _
      $region12: #{tpu_custom_call.1} parent=5 // pred_fallthru
        _
      %p133 = scmp.lt.s32.totalorder %s16, 4
      // Predicated region
      $region17: #{tpu_custom_call.1} parent=5 // pred_check
        %p134 = pneg %p133
      $region18: #{tpu_custom_call.1} parent=5 // pred_check_branch
        %136 = sbr.rel (%p134) target = $region20
      $region19: #{tpu_custom_call.1} parent=5 // pred_region
        // Predicated region
        $region21: #{tpu_custom_call.1} parent=19 // pred_check
          %p137 = pneg %p36
        $region22: #{tpu_custom_call.1} parent=19 // pred_check_branch
          %139 = sbr.rel (%p137) target = $region24
        $region23: #{tpu_custom_call.1} parent=19 // pred_region
          %p140 = scmp.lt.s32.totalorder %s16, 3
          %s141 = scalar_select %p140, %s16, 3
          %s142 = smul.addr %s141, 25
          %s143 = smul.addr %s142, 4
          %s144 = scalar_lea.vmem %s0, %s143
        $region24: #{tpu_custom_call.1} parent=19 // pred_fallthru
          _
      $region20: #{tpu_custom_call.1} parent=5 // pred_fallthru
        _
      %p145 = scmp.le.s32.totalorder 1, %s16
      %p146 = scmp.lt.s32.totalorder %s16, 5
      %p147 = pnand %p145, %p146
      %p148 = pneg %p147
      // Predicated region
      $region25: #{tpu_custom_call.1} parent=5 // pred_check
        _
      $region26: #{tpu_custom_call.1} parent=5 // pred_check_branch
        %150 = sbr.rel (%p147) target = $region28
      $region27: #{tpu_custom_call.1} parent=5 // pred_region
        %s151 = ssub.s32 %s16, 1
        %p152 = scmp.lt.s32.totalorder %s21, 3
        %s153 = scalar_select %p152, %s21, 3
        %s154 = smul.addr %s153, 25
        %s155 = smul.addr %s154, 4
        %s156 = scalar_lea.vmem %s0, %s155
        %p157 = pneg %p42
        %p158 = pneg %p39
        %p159 = pneg %p63
        %p160 = pneg %p60
        %p161 = pneg %p89
        %p162 = pneg %p86
        %s163 = sand.u32 %s76, 1
        %s164 = scalar_lea.sflag [#allocation3], %s163
        %s165 = sand.u32 %s76, 1
        %s166 = smul.addr %s165, 72
        %s167 = scalar_lea.vmem [#allocation2], %s166
        %p168 = pneg %p115
        %p169 = pneg %p112
        %s170 = sand.u32 %s102, 1
        %s171 = scalar_lea.sflag [#allocation5], %s170
        %s172 = sand.u32 %s102, 1
        %s173 = smul.addr %s172, 8
        %s174 = scalar_lea.vmem [#allocation4], %s173
        %p175 = scmp.lt.s32.totalorder %s21, 3
        %s176 = scalar_select %p175, %s21, 3
        %s177 = smul.addr %s176, 25
        %s178 = smul.addr %s177, 4
        %s179 = scalar_lea.vmem %s0, %s178
        %s180 = smul.u32 18, %s21
        %v182 = vld [vmem:[%s179] sm:$0xf]
        %v183 = vld [vmem:[%s179 + $0x4] sm:$0xf]
        %v184 = vld [vmem:[%s179 + $0x8] sm:$0xf]
        %v185 = vld [vmem:[%s179 + $0xc] sm:$0xf]
        %v186 = vld [vmem:[%s179 + $0x10] sm:$0xf]
        %v187 = vld [vmem:[%s179 + $0x14] sm:$0xf]
        %v188 = vld [vmem:[%s179 + $0x18] sm:$0xf]
        %v189 = vld [vmem:[%s179 + $0x1c] sm:$0xf]
        %v190 = vld [vmem:[%s179 + $0x20] sm:$0xf]
        %v191 = vld [vmem:[%s179 + $0x24] sm:$0xf]
        %v192 = vld [vmem:[%s179 + $0x28] sm:$0xf]
        %v193 = vld [vmem:[%s179 + $0x2c] sm:$0xf]
        %v194 = vld [vmem:[%s179 + $0x30] sm:$0xf]
        %v195 = vld [vmem:[%s179 + $0x34] sm:$0xf]
        %v196 = vld [vmem:[%s179 + $0x38] sm:$0xf]
        %v197 = vld [vmem:[%s179 + $0x3c] sm:$0xf]
        %v198 = vld [vmem:[%s179 + $0x40] sm:$0xf]
        %v199 = vld [vmem:[%s179 + $0x44] sm:$0xf]
        %v200 = vld [vmem:[%s1] sm:$0x3]
        %v201 = vld [vmem:[%s179 + $0x48] sm:$0x1]
        %s202 = scalar_lea.vmem %s1, 2
        %v203 = vld [vmem:[%s202] sm:$0x3]
        %v223 = vunpack.c.l.b16 %v182
        %v224 = vunpack.c.l.b16 %v183
        %v225 = vunpack.c.l.b16 %v184
        %v226 = vunpack.c.l.b16 %v185
        %v227 = vunpack.c.l.b16 %v186
        %v228 = vunpack.c.l.b16 %v187
        %v229 = vunpack.c.l.b16 %v188
        %v230 = vunpack.c.l.b16 %v189
        %v231 = vunpack.c.l.b16 %v190
        %v232 = vunpack.c.l.b16 %v191
        %v233 = vunpack.c.l.b16 %v192
        %v234 = vunpack.c.l.b16 %v193
        %v235 = vunpack.c.l.b16 %v194
        %v236 = vunpack.c.l.b16 %v195
        %v237 = vunpack.c.l.b16 %v196
        %v238 = vunpack.c.l.b16 %v197
        %v239 = vunpack.c.l.b16 %v198
        %v240 = vunpack.c.l.b16 %v199
        %v241 = vunpack.c.l.b16 %v201
        %v242 = vpack.c.b16 %v224, %v223
        %v243 = vpack.c.b16 %v226, %v225
        %v244 = vpack.c.b16 %v228, %v227
        %v245 = vpack.c.b16 %v230, %v229
        %v246 = vpack.c.b16 %v232, %v231
        %v247 = vpack.c.b16 %v234, %v233
        %v248 = vpack.c.b16 %v236, %v235
        %v249 = vpack.c.b16 %v238, %v237
        %v250 = vpack.c.b16 %v240, %v239
        %v251 = vpack.c.b16 %v241, %v241
        %vm252 = vsmask.f32 7424
        %v254 = vshrl.u32 %v242, 16
        %v256 = vshll.u32 %v242, 16
        %v258 = vrot.slane %v256, 1
        %v259 = vor.u32 %v254, %v258
        %v261 = vshll.u32 %v243, 16
        %v263 = vrot.slane %v261, 1
        %v264 = vsel %vm252, %v259, %v263
        %v265 = vshrl.u32 %v243, 16
        %v267 = vor.u32 %v265, %v263
        %v269 = vshll.u32 %v244, 16
        %v271 = vrot.slane %v269, 1
        %v272 = vsel %vm252, %v267, %v271
        %v273 = vshrl.u32 %v244, 16
        %v275 = vor.u32 %v273, %v271
        %v277 = vshll.u32 %v245, 16
        %v279 = vrot.slane %v277, 1
        %v280 = vsel %vm252, %v275, %v279
        %v281 = vshrl.u32 %v245, 16
        %v283 = vor.u32 %v281, %v279
        %v285 = vshll.u32 %v246, 16
        %v287 = vrot.slane %v285, 1
        %v288 = vsel %vm252, %v283, %v287
        %v289 = vshrl.u32 %v246, 16
        %v291 = vor.u32 %v289, %v287
        %v293 = vshll.u32 %v247, 16
        %v295 = vrot.slane %v293, 1
        %v296 = vsel %vm252, %v291, %v295
        %v297 = vshrl.u32 %v247, 16
        %v299 = vor.u32 %v297, %v295
        %v301 = vshll.u32 %v248, 16
        %v303 = vrot.slane %v301, 1
        %v304 = vsel %vm252, %v299, %v303
        %v305 = vshrl.u32 %v248, 16
        %v307 = vor.u32 %v305, %v303
        %v309 = vshll.u32 %v249, 16
        %v311 = vrot.slane %v309, 1
        %v312 = vsel %vm252, %v307, %v311
        %v313 = vshrl.u32 %v249, 16
        %v315 = vor.u32 %v313, %v311
        %v317 = vshll.u32 %v250, 16
        %v319 = vrot.slane %v317, 1
        %v320 = vsel %vm252, %v315, %v319
        %v321 = vshrl.u32 %v250, 16
        %v323 = vor.u32 %v321, %v319
        %v325 = vshll.u32 %v251, 16
        %v327 = vrot.slane %v325, 1
        %v328 = vsel %vm252, %v323, %v327
        %vm329 = vcmask 31744
        %v331 = vsel %vm329, %v264, 0
        %v334 = vsel %vm329, %v272, 0
        %v337 = vsel %vm329, %v280, 0
        %v340 = vsel %vm329, %v288, 0
        %v343 = vsel %vm329, %v296, 0
        %v346 = vsel %vm329, %v304, 0
        %v349 = vsel %vm329, %v312, 0
        %v352 = vsel %vm329, %v320, 0
        %v355 = vsel %vm329, %v328, 0
        %vm357 = vcmask 1041408
        %v359 = vsel %vm357, %v203, 0
        %361 = vmatprep.subr.bf16.mxu0 0
        %362 = vmatpush1.bf16.msra.mxu0 %v359
        %363 = vmatprep.subr.bf16.mxu0 0
        %364 = vmatpush1.bf16.msra.mxu0 0
        %365 = vmatprep.subr.bf16.mxu0 0
        %366 = vmatpush1.bf16.msra.mxu0 0
        %367 = vmatprep.subr.bf16.mxu0 0
        %368 = vmatpush1.bf16.msra.mxu0 0
        %369 = vmatprep.subr.bf16.mxu0 0
        %370 = vmatpush1.bf16.msra.mxu0 0
        %371 = vmatprep.subr.bf16.mxu0 0
        %372 = vmatpush1.bf16.msra.mxu0 0
        %373 = vmatprep.subr.bf16.mxu0 0
        %374 = vmatpush1.bf16.msra.mxu0 0
        %375 = vmatprep.subr.bf16.mxu0 0
        %376 = vmatpush1.bf16.msra.mxu0 0
        %377 = vmatprep.subr.bf16.mxu0 0
        %378 = vmatpush1.bf16.msra.mxu0 0
        %379 = vmatprep.subr.bf16.mxu0 0
        %380 = vmatpush1.bf16.msra.mxu0 0
        %381 = vmatprep.subr.bf16.mxu0 0
        %382 = vmatpush1.bf16.msra.mxu0 0
        %383 = vmatprep.subr.bf16.mxu0 0
        %384 = vmatpush1.bf16.msra.mxu0 0
        %385 = vmatprep.subr.bf16.mxu0 0
        %386 = vmatpush1.bf16.msra.mxu0 0
        %387 = vmatprep.subr.bf16.mxu0 0
        %388 = vmatpush1.bf16.msra.mxu0 0
        %389 = vmatprep.subr.bf16.mxu0 0
        %390 = vmatpush1.bf16.msra.mxu0 0
        %391 = vmatprep.subr.bf16.mxu0 0
        %392 = vmatpush1.bf16.msra.mxu0 0
        %393 = vmatprep.mubr.bf16.mxu0 0
        %394 = vmatmul.mubr.bf16.gmra.mrb[0].mxu0 %v331
        %v395 = vpop.f32.mrb[0].mxu0
        %v396 = vadd.f32 0.0, %v395
        %v397 = vpop.f32.mrb[0].mxu0
        %v398 = vpop.f32.mrb[0].mxu0
        %v399 = vadd.f32 0.0, %v398
        %v400 = vpop.f32.mrb[0].mxu0
        %401 = vmatprep.mubr.bf16.mxu0 0
        %402 = vmatmul.mubr.bf16.gmra.mrb[0].mxu0 %v334
        %v403 = vpop.f32.mrb[0].mxu0
        %v404 = vadd.f32 0.0, %v403
        %v405 = vpop.f32.mrb[0].mxu0
        %v406 = vpop.f32.mrb[0].mxu0
        %v407 = vadd.f32 0.0, %v406
        %v408 = vpop.f32.mrb[0].mxu0
        %409 = vmatprep.mubr.bf16.mxu0 0
        %410 = vmatmul.mubr.bf16.gmra.mrb[0].mxu0 %v337
        %v411 = vpop.f32.mrb[0].mxu0
        %v412 = vadd.f32 0.0, %v411
        %v413 = vpop.f32.mrb[0].mxu0
        %v414 = vpop.f32.mrb[0].mxu0
        %v415 = vadd.f32 0.0, %v414
        %v416 = vpop.f32.mrb[0].mxu0
        %417 = vmatprep.mubr.bf16.mxu0 0
        %418 = vmatmul.mubr.bf16.gmra.mrb[0].mxu0 %v340
        %v419 = vpop.f32.mrb[0].mxu0
        %v420 = vadd.f32 0.0, %v419
        %v421 = vpop.f32.mrb[0].mxu0
        %v422 = vpop.f32.mrb[0].mxu0
        %v423 = vadd.f32 0.0, %v422
        %v424 = vpop.f32.mrb[0].mxu0
        %425 = vmatprep.mubr.bf16.mxu0 0
        %426 = vmatmul.mubr.bf16.gmra.mrb[0].mxu0 %v343
        %v427 = vpop.f32.mrb[0].mxu0
        %v428 = vadd.f32 0.0, %v427
        %v429 = vpop.f32.mrb[0].mxu0
        %v430 = vpop.f32.mrb[0].mxu0
        %v431 = vadd.f32 0.0, %v430
        %v432 = vpop.f32.mrb[0].mxu0
        %433 = vmatprep.mubr.bf16.mxu0 0
        %434 = vmatmul.mubr.bf16.gmra.mrb[0].mxu0 %v346
        %v435 = vpop.f32.mrb[0].mxu0
        %v436 = vadd.f32 0.0, %v435
        %v437 = vpop.f32.mrb[0].mxu0
        %v438 = vpop.f32.mrb[0].mxu0
        %v439 = vadd.f32 0.0, %v438
        %v440 = vpop.f32.mrb[0].mxu0
        %441 = vmatprep.mubr.bf16.mxu0 0
        %442 = vmatmul.mubr.bf16.gmra.mrb[0].mxu0 %v349
        %v443 = vpop.f32.mrb[0].mxu0
        %v444 = vadd.f32 0.0, %v443
        %v445 = vpop.f32.mrb[0].mxu0
        %v446 = vpop.f32.mrb[0].mxu0
        %v447 = vadd.f32 0.0, %v446
        %v448 = vpop.f32.mrb[0].mxu0
        %449 = vmatprep.mubr.bf16.mxu0 0
        %450 = vmatmul.mubr.bf16.gmra.mrb[0].mxu0 %v352
        %v451 = vpop.f32.mrb[0].mxu0
        %v452 = vadd.f32 0.0, %v451
        %v453 = vpop.f32.mrb[0].mxu0
        %v454 = vpop.f32.mrb[0].mxu0
        %v455 = vadd.f32 0.0, %v454
        %v456 = vpop.f32.mrb[0].mxu0
        %457 = vmatprep.mubr.bf16.mxu0 0
        %458 = vmatmul.mubr.bf16.gmra.mrb[0].mxu0 %v355
        %v459 = vpop.f32.mrb[0].mxu0
        %v460 = vadd.f32 0.0, %v459
        %v461 = vpop.f32.mrb[0].mxu0
        %v462 = vpop.f32.mrb[0].mxu0
        %v463 = vadd.f32 0.0, %v462
        %v464 = vpop.f32.mrb[0].mxu0
        %465 = vdwg.mxu0
        %v466 = vsel %vm329, %v242, 0
        %v468 = vsel %vm329, %v243, 0
        %v470 = vsel %vm329, %v244, 0
        %v472 = vsel %vm329, %v245, 0
        %v474 = vsel %vm329, %v246, 0
        %v476 = vsel %vm329, %v247, 0
        %v478 = vsel %vm329, %v248, 0
        %v480 = vsel %vm329, %v249, 0
        %v482 = vsel %vm329, %v250, 0
        %v485 = vsel %vm357, %v200, 0
        %487 = vmatprep.subr.bf16.mxu0 0
        %488 = vmatpush1.bf16.msra.mxu0 %v485
        %489 = vmatprep.subr.bf16.mxu0 0
        %490 = vmatpush1.bf16.msra.mxu0 0
        %491 = vmatprep.subr.bf16.mxu0 0
        %492 = vmatpush1.bf16.msra.mxu0 0
        %493 = vmatprep.subr.bf16.mxu0 0
        %494 = vmatpush1.bf16.msra.mxu0 0
        %495 = vmatprep.subr.bf16.mxu0 0
        %496 = vmatpush1.bf16.msra.mxu0 0
        %497 = vmatprep.subr.bf16.mxu0 0
        %498 = vmatpush1.bf16.msra.mxu0 0
        %499 = vmatprep.subr.bf16.mxu0 0
        %500 = vmatpush1.bf16.msra.mxu0 0
        %501 = vmatprep.subr.bf16.mxu0 0
        %502 = vmatpush1.bf16.msra.mxu0 0
        %503 = vmatprep.subr.bf16.mxu0 0
        %504 = vmatpush1.bf16.msra.mxu0 0
        %505 = vmatprep.subr.bf16.mxu0 0
        %506 = vmatpush1.bf16.msra.mxu0 0
        %507 = vmatprep.subr.bf16.mxu0 0
        %508 = vmatpush1.bf16.msra.mxu0 0
        %509 = vmatprep.subr.bf16.mxu0 0
        %510 = vmatpush1.bf16.msra.mxu0 0
        %511 = vmatprep.subr.bf16.mxu0 0
        %512 = vmatpush1.bf16.msra.mxu0 0
        %513 = vmatprep.subr.bf16.mxu0 0
        %514 = vmatpush1.bf16.msra.mxu0 0
        %515 = vmatprep.subr.bf16.mxu0 0
        %516 = vmatpush1.bf16.msra.mxu0 0
        %517 = vmatprep.subr.bf16.mxu0 0
        %518 = vmatpush1.bf16.msra.mxu0 0
        %519 = vmatprep.mubr.bf16.mxu0 0
        %520 = vmatmul.mubr.bf16.gmra.mrb[0].mxu0 %v466
        %v521 = vpop.f32.mrb[0].mxu0
        %v522 = vadd.f32 %v396, %v521
        %v523 = vpop.f32.mrb[0].mxu0
        %v524 = vpop.f32.mrb[0].mxu0
        %v525 = vadd.f32 %v399, %v524
        %v526 = vpop.f32.mrb[0].mxu0
        %527 = vmatprep.mubr.bf16.mxu0 0
        %528 = vmatmul.mubr.bf16.gmra.mrb[0].mxu0 %v468
        %v529 = vpop.f32.mrb[0].mxu0
        %v530 = vadd.f32 %v404, %v529
        %v531 = vpop.f32.mrb[0].mxu0
        %v532 = vpop.f32.mrb[0].mxu0
        %v533 = vadd.f32 %v407, %v532
        %v534 = vpop.f32.mrb[0].mxu0
        %535 = vmatprep.mubr.bf16.mxu0 0
        %536 = vmatmul.mubr.bf16.gmra.mrb[0].mxu0 %v470
        %v537 = vpop.f32.mrb[0].mxu0
        %v538 = vadd.f32 %v412, %v537
        %v539 = vpop.f32.mrb[0].mxu0
        %v540 = vpop.f32.mrb[0].mxu0
        %v541 = vadd.f32 %v415, %v540
        %v542 = vpop.f32.mrb[0].mxu0
        %543 = vmatprep.mubr.bf16.mxu0 0
        %544 = vmatmul.mubr.bf16.gmra.mrb[0].mxu0 %v472
        %v545 = vpop.f32.mrb[0].mxu0
        %v546 = vadd.f32 %v420, %v545
        %v547 = vpop.f32.mrb[0].mxu0
        %v548 = vpop.f32.mrb[0].mxu0
        %v549 = vadd.f32 %v423, %v548
        %v550 = vpop.f32.mrb[0].mxu0
        %551 = vmatprep.mubr.bf16.mxu0 0
        %552 = vmatmul.mubr.bf16.gmra.mrb[0].mxu0 %v474
        %v553 = vpop.f32.mrb[0].mxu0
        %v554 = vadd.f32 %v428, %v553
        %v555 = vpop.f32.mrb[0].mxu0
        %v556 = vpop.f32.mrb[0].mxu0
        %v557 = vadd.f32 %v431, %v556
        %v558 = vpop.f32.mrb[0].mxu0
        %559 = vmatprep.mubr.bf16.mxu0 0
        %560 = vmatmul.mubr.bf16.gmra.mrb[0].mxu0 %v476
        %v561 = vpop.f32.mrb[0].mxu0
        %v562 = vadd.f32 %v436, %v561
        %v563 = vpop.f32.mrb[0].mxu0
        %v564 = vpop.f32.mrb[0].mxu0
        %v565 = vadd.f32 %v439, %v564
        %v566 = vpop.f32.mrb[0].mxu0
        %567 = vmatprep.mubr.bf16.mxu0 0
        %568 = vmatmul.mubr.bf16.gmra.mrb[0].mxu0 %v478
        %v569 = vpop.f32.mrb[0].mxu0
        %v570 = vadd.f32 %v444, %v569
        %v571 = vpop.f32.mrb[0].mxu0
        %v572 = vpop.f32.mrb[0].mxu0
        %v573 = vadd.f32 %v447, %v572
        %v574 = vpop.f32.mrb[0].mxu0
        %575 = vmatprep.mubr.bf16.mxu0 0
        %576 = vmatmul.mubr.bf16.gmra.mrb[0].mxu0 %v480
        %v577 = vpop.f32.mrb[0].mxu0
        %v578 = vadd.f32 %v452, %v577
        %v579 = vpop.f32.mrb[0].mxu0
        %v580 = vpop.f32.mrb[0].mxu0
        %v581 = vadd.f32 %v455, %v580
        %v582 = vpop.f32.mrb[0].mxu0
        %583 = vmatprep.mubr.bf16.mxu0 0
        %584 = vmatmul.mubr.bf16.gmra.mrb[0].mxu0 %v482
        %v585 = vpop.f32.mrb[0].mxu0
        %v586 = vadd.f32 %v460, %v585
        %v587 = vpop.f32.mrb[0].mxu0
        %v588 = vpop.f32.mrb[0].mxu0
        %v589 = vadd.f32 %v463, %v588
        %v590 = vpop.f32.mrb[0].mxu0
        %591 = vdwg.mxu0
        %v592 = vld [vmem:[%s179] sm:$0xe]
        %s593 = scalar_lea.vmem %s1, 4
        %v594 = vld [vmem:[%s593] sm:$0x3]
        %v596 = vunpack.c.l.b16 %v592
        %v597 = vpack.c.b16 %v224, %v596
        %vm598 = vcmask 1046528
        %v599 = vrot.slane %v597, 1
        %v600 = vrot.slane %v243, 1
        %v601 = vsel %vm598, %v599, %v600
        %v602 = vrot.slane %v244, 1
        %v603 = vsel %vm598, %v600, %v602
        %v604 = vrot.slane %v245, 1
        %v605 = vsel %vm598, %v602, %v604
        %v606 = vrot.slane %v246, 1
        %v607 = vsel %vm598, %v604, %v606
        %v608 = vrot.slane %v247, 1
        %v609 = vsel %vm598, %v606, %v608
        %v610 = vrot.slane %v248, 1
        %v611 = vsel %vm598, %v608, %v610
        %v612 = vrot.slane %v249, 1
        %v613 = vsel %vm598, %v610, %v612
        %v614 = vrot.slane %v250, 1
        %v615 = vsel %vm598, %v612, %v614
        %v616 = vrot.slane %v251, 1
        %v617 = vsel %vm598, %v614, %v616
        %v619 = vsel %vm329, %v601, 0
        %v622 = vsel %vm329, %v603, 0
        %v625 = vsel %vm329, %v605, 0
        %v628 = vsel %vm329, %v607, 0
        %v631 = vsel %vm329, %v609, 0
        %v634 = vsel %vm329, %v611, 0
        %v637 = vsel %vm329, %v613, 0
        %v640 = vsel %vm329, %v615, 0
        %v643 = vsel %vm329, %v617, 0
        %v646 = vsel %vm357, %v594, 0
        %648 = vmatprep.subr.bf16.mxu0 0
        %649 = vmatpush1.bf16.msra.mxu0 %v646
        %650 = vmatprep.subr.bf16.mxu0 0
        %651 = vmatpush1.bf16.msra.mxu0 0
        %652 = vmatprep.subr.bf16.mxu0 0
        %653 = vmatpush1.bf16.msra.mxu0 0
        %654 = vmatprep.subr.bf16.mxu0 0
        %655 = vmatpush1.bf16.msra.mxu0 0
        %656 = vmatprep.subr.bf16.mxu0 0
        %657 = vmatpush1.bf16.msra.mxu0 0
        %658 = vmatprep.subr.bf16.mxu0 0
        %659 = vmatpush1.bf16.msra.mxu0 0
        %660 = vmatprep.subr.bf16.mxu0 0
        %661 = vmatpush1.bf16.msra.mxu0 0
        %662 = vmatprep.subr.bf16.mxu0 0
        %663 = vmatpush1.bf16.msra.mxu0 0
        %664 = vmatprep.subr.bf16.mxu0 0
        %665 = vmatpush1.bf16.msra.mxu0 0
        %666 = vmatprep.subr.bf16.mxu0 0
        %667 = vmatpush1.bf16.msra.mxu0 0
        %668 = vmatprep.subr.bf16.mxu0 0
        %669 = vmatpush1.bf16.msra.mxu0 0
        %670 = vmatprep.subr.bf16.mxu0 0
        %671 = vmatpush1.bf16.msra.mxu0 0
        %672 = vmatprep.subr.bf16.mxu0 0
        %673 = vmatpush1.bf16.msra.mxu0 0
        %674 = vmatprep.subr.bf16.mxu0 0
        %675 = vmatpush1.bf16.msra.mxu0 0
        %676 = vmatprep.subr.bf16.mxu0 0
        %677 = vmatpush1.bf16.msra.mxu0 0
        %678 = vmatprep.subr.bf16.mxu0 0
        %679 = vmatpush1.bf16.msra.mxu0 0
        %680 = vmatprep.mubr.bf16.mxu0 0
        %681 = vmatmul.mubr.bf16.gmra.mrb[0].mxu0 %v619
        %v682 = vpop.f32.mrb[0].mxu0
        %v683 = vadd.f32 0.0, %v682
        %v684 = vpop.f32.mrb[0].mxu0
        %v685 = vpop.f32.mrb[0].mxu0
        %v686 = vadd.f32 0.0, %v685
        %v687 = vpop.f32.mrb[0].mxu0
        %688 = vmatprep.mubr.bf16.mxu0 0
        %689 = vmatmul.mubr.bf16.gmra.mrb[0].mxu0 %v622
        %v690 = vpop.f32.mrb[0].mxu0
        %v691 = vadd.f32 0.0, %v690
        %v692 = vpop.f32.mrb[0].mxu0
        %v693 = vpop.f32.mrb[0].mxu0
        %v694 = vadd.f32 0.0, %v693
        %v695 = vpop.f32.mrb[0].mxu0
        %696 = vmatprep.mubr.bf16.mxu0 0
        %697 = vmatmul.mubr.bf16.gmra.mrb[0].mxu0 %v625
        %v698 = vpop.f32.mrb[0].mxu0
        %v699 = vadd.f32 0.0, %v698
        %v700 = vpop.f32.mrb[0].mxu0
        %v701 = vpop.f32.mrb[0].mxu0
        %v702 = vadd.f32 0.0, %v701
        %v703 = vpop.f32.mrb[0].mxu0
        %704 = vmatprep.mubr.bf16.mxu0 0
        %705 = vmatmul.mubr.bf16.gmra.mrb[0].mxu0 %v628
        %v706 = vpop.f32.mrb[0].mxu0
        %v707 = vadd.f32 0.0, %v706
        %v708 = vpop.f32.mrb[0].mxu0
        %v709 = vpop.f32.mrb[0].mxu0
        %v710 = vadd.f32 0.0, %v709
        %v711 = vpop.f32.mrb[0].mxu0
        %712 = vmatprep.mubr.bf16.mxu0 0
        %713 = vmatmul.mubr.bf16.gmra.mrb[0].mxu0 %v631
        %v714 = vpop.f32.mrb[0].mxu0
        %v715 = vadd.f32 0.0, %v714
        %v716 = vpop.f32.mrb[0].mxu0
        %v717 = vpop.f32.mrb[0].mxu0
        %v718 = vadd.f32 0.0, %v717
        %v719 = vpop.f32.mrb[0].mxu0
        %720 = vmatprep.mubr.bf16.mxu0 0
        %721 = vmatmul.mubr.bf16.gmra.mrb[0].mxu0 %v634
        %v722 = vpop.f32.mrb[0].mxu0
        %v723 = vadd.f32 0.0, %v722
        %v724 = vpop.f32.mrb[0].mxu0
        %v725 = vpop.f32.mrb[0].mxu0
        %v726 = vadd.f32 0.0, %v725
        %v727 = vpop.f32.mrb[0].mxu0
        %728 = vmatprep.mubr.bf16.mxu0 0
        %729 = vmatmul.mubr.bf16.gmra.mrb[0].mxu0 %v637
        %v730 = vpop.f32.mrb[0].mxu0
        %v731 = vadd.f32 0.0, %v730
        %v732 = vpop.f32.mrb[0].mxu0
        %v733 = vpop.f32.mrb[0].mxu0
        %v734 = vadd.f32 0.0, %v733
        %v735 = vpop.f32.mrb[0].mxu0
        %736 = vmatprep.mubr.bf16.mxu0 0
        %737 = vmatmul.mubr.bf16.gmra.mrb[0].mxu0 %v640
        %v738 = vpop.f32.mrb[0].mxu0
        %v739 = vadd.f32 0.0, %v738
        %v740 = vpop.f32.mrb[0].mxu0
        %v741 = vpop.f32.mrb[0].mxu0
        %v742 = vadd.f32 0.0, %v741
        %v743 = vpop.f32.mrb[0].mxu0
        %744 = vmatprep.mubr.bf16.mxu0 0
        %745 = vmatmul.mubr.bf16.gmra.mrb[0].mxu0 %v643
        %v746 = vpop.f32.mrb[0].mxu0
        %v747 = vadd.f32 0.0, %v746
        %v748 = vpop.f32.mrb[0].mxu0
        %v749 = vpop.f32.mrb[0].mxu0
        %v750 = vadd.f32 0.0, %v749
        %v751 = vpop.f32.mrb[0].mxu0
        %752 = vdwg.mxu0
        %v753 = vadd.f32 %v522, %v683
        %v754 = vadd.f32 %v525, %v686
        %v755 = vadd.f32 %v530, %v691
        %v756 = vadd.f32 %v533, %v694
        %v757 = vadd.f32 %v538, %v699
        %v758 = vadd.f32 %v541, %v702
        %v759 = vadd.f32 %v546, %v707
        %v760 = vadd.f32 %v549, %v710
        %v761 = vadd.f32 %v554, %v715
        %v762 = vadd.f32 %v557, %v718
        %v763 = vadd.f32 %v562, %v723
        %v764 = vadd.f32 %v565, %v726
        %v765 = vadd.f32 %v570, %v731
        %v766 = vadd.f32 %v573, %v734
        %v767 = vadd.f32 %v578, %v739
        %v768 = vadd.f32 %v581, %v742
        %v769 = vadd.f32 %v586, %v747
        %v770 = vadd.f32 %v589, %v750
        %v771 = vld [vmem:[%s179 + $0x8] sm:$0xe]
        %v772 = vld [vmem:[%s179 + $0xc] sm:$0xf]
        %v773 = vld [vmem:[%s179 + $0x10] sm:$0xf]
        %v774 = vld [vmem:[%s179 + $0x14] sm:$0xf]
        %v775 = vld [vmem:[%s179 + $0x18] sm:$0xf]
        %v776 = vld [vmem:[%s179 + $0x1c] sm:$0xf]
        %v777 = vld [vmem:[%s179 + $0x20] sm:$0xf]
        %v778 = vld [vmem:[%s179 + $0x24] sm:$0xf]
        %v779 = vld [vmem:[%s179 + $0x28] sm:$0xf]
        %v780 = vld [vmem:[%s179 + $0x2c] sm:$0xf]
        %v781 = vld [vmem:[%s179 + $0x30] sm:$0xf]
        %v782 = vld [vmem:[%s179 + $0x34] sm:$0xf]
        %v783 = vld [vmem:[%s179 + $0x38] sm:$0xf]
        %v784 = vld [vmem:[%s179 + $0x3c] sm:$0xf]
        %v785 = vld [vmem:[%s179 + $0x40] sm:$0xf]
        %v786 = vld [vmem:[%s179 + $0x44] sm:$0xf]
        %v787 = vld [vmem:[%s179 + $0x48] sm:$0xf]
        %v788 = vld [vmem:[%s179 + $0x4c] sm:$0xf]
        %v789 = vld [vmem:[%s179 + $0x50] sm:$0x1]
        %s790 = scalar_lea.vmem %s1, 6
        %v791 = vld [vmem:[%s790] sm:$0x3]
        %v811 = vunpack.c.l.b16 %v771
        %v812 = vunpack.c.l.b16 %v772
        %v813 = vunpack.c.l.b16 %v773
        %v814 = vunpack.c.l.b16 %v774
        %v815 = vunpack.c.l.b16 %v775
        %v816 = vunpack.c.l.b16 %v776
        %v817 = vunpack.c.l.b16 %v777
        %v818 = vunpack.c.l.b16 %v778
        %v819 = vunpack.c.l.b16 %v779
        %v820 = vunpack.c.l.b16 %v780
        %v821 = vunpack.c.l.b16 %v781
        %v822 = vunpack.c.l.b16 %v782
        %v823 = vunpack.c.l.b16 %v783
        %v824 = vunpack.c.l.b16 %v784
        %v825 = vunpack.c.l.b16 %v785
        %v826 = vunpack.c.l.b16 %v786
        %v827 = vunpack.c.l.b16 %v787
        %v828 = vunpack.c.l.b16 %v788
        %v829 = vunpack.c.l.b16 %v789
        %v830 = vpack.c.b16 %v812, %v811
        %v831 = vpack.c.b16 %v814, %v813
        %v832 = vpack.c.b16 %v816, %v815
        %v833 = vpack.c.b16 %v818, %v817
        %v834 = vpack.c.b16 %v820, %v819
        %v835 = vpack.c.b16 %v822, %v821
        %v836 = vpack.c.b16 %v824, %v823
        %v837 = vpack.c.b16 %v826, %v825
        %v838 = vpack.c.b16 %v828, %v827
        %v839 = vpack.c.b16 %v829, %v829
        %v840 = vrot.slane %v830, 1
        %v841 = vrot.slane %v831, 1
        %v842 = vsel %vm598, %v840, %v841
        %v843 = vrot.slane %v832, 1
        %v844 = vsel %vm598, %v841, %v843
        %v845 = vrot.slane %v833, 1
        %v846 = vsel %vm598, %v843, %v845
        %v847 = vrot.slane %v834, 1
        %v848 = vsel %vm598, %v845, %v847
        %v849 = vrot.slane %v835, 1
        %v850 = vsel %vm598, %v847, %v849
        %v851 = vrot.slane %v836, 1
        %v852 = vsel %vm598, %v849, %v851
        %v853 = vrot.slane %v837, 1
        %v854 = vsel %vm598, %v851, %v853
        %v855 = vrot.slane %v838, 1
        %v856 = vsel %vm598, %v853, %v855
        %v857 = vrot.slane %v839, 1
        %v858 = vsel %vm598, %v855, %v857
        %v860 = vsel %vm329, %v842, 0
        %v863 = vsel %vm329, %v844, 0
        %v866 = vsel %vm329, %v846, 0
        %v869 = vsel %vm329, %v848, 0
        %v872 = vsel %vm329, %v850, 0
        %v875 = vsel %vm329, %v852, 0
        %v878 = vsel %vm329, %v854, 0
        %v881 = vsel %vm329, %v856, 0
        %v884 = vsel %vm329, %v858, 0
        %v887 = vsel %vm357, %v791, 0
        %889 = vmatprep.subr.bf16.mxu0 0
        %890 = vmatpush1.bf16.msra.mxu0 %v887
        %891 = vmatprep.subr.bf16.mxu0 0
        %892 = vmatpush1.bf16.msra.mxu0 0
        %893 = vmatprep.subr.bf16.mxu0 0
        %894 = vmatpush1.bf16.msra.mxu0 0
        %895 = vmatprep.subr.bf16.mxu0 0
        %896 = vmatpush1.bf16.msra.mxu0 0
        %897 = vmatprep.subr.bf16.mxu0 0
        %898 = vmatpush1.bf16.msra.mxu0 0
        %899 = vmatprep.subr.bf16.mxu0 0
        %900 = vmatpush1.bf16.msra.mxu0 0
        %901 = vmatprep.subr.bf16.mxu0 0
        %902 = vmatpush1.bf16.msra.mxu0 0
        %903 = vmatprep.subr.bf16.mxu0 0
        %904 = vmatpush1.bf16.msra.mxu0 0
        %905 = vmatprep.subr.bf16.mxu0 0
        %906 = vmatpush1.bf16.msra.mxu0 0
        %907 = vmatprep.subr.bf16.mxu0 0
        %908 = vmatpush1.bf16.msra.mxu0 0
        %909 = vmatprep.subr.bf16.mxu0 0
        %910 = vmatpush1.bf16.msra.mxu0 0
        %911 = vmatprep.subr.bf16.mxu0 0
        %912 = vmatpush1.bf16.msra.mxu0 0
        %913 = vmatprep.subr.bf16.mxu0 0
        %914 = vmatpush1.bf16.msra.mxu0 0
        %915 = vmatprep.subr.bf16.mxu0 0
        %916 = vmatpush1.bf16.msra.mxu0 0
        %917 = vmatprep.subr.bf16.mxu0 0
        %918 = vmatpush1.bf16.msra.mxu0 0
        %919 = vmatprep.subr.bf16.mxu0 0
        %920 = vmatpush1.bf16.msra.mxu0 0
        %921 = vmatprep.mubr.bf16.mxu0 0
        %922 = vmatmul.mubr.bf16.gmra.mrb[0].mxu0 %v860
        %v923 = vpop.f32.mrb[0].mxu0
        %v924 = vadd.f32 0.0, %v923
        %v925 = vpop.f32.mrb[0].mxu0
        %v926 = vpop.f32.mrb[0].mxu0
        %v927 = vadd.f32 0.0, %v926
        %v928 = vpop.f32.mrb[0].mxu0
        %929 = vmatprep.mubr.bf16.mxu0 0
        %930 = vmatmul.mubr.bf16.gmra.mrb[0].mxu0 %v863
        %v931 = vpop.f32.mrb[0].mxu0
        %v932 = vadd.f32 0.0, %v931
        %v933 = vpop.f32.mrb[0].mxu0
        %v934 = vpop.f32.mrb[0].mxu0
        %v935 = vadd.f32 0.0, %v934
        %v936 = vpop.f32.mrb[0].mxu0
        %937 = vmatprep.mubr.bf16.mxu0 0
        %938 = vmatmul.mubr.bf16.gmra.mrb[0].mxu0 %v866
        %v939 = vpop.f32.mrb[0].mxu0
        %v940 = vadd.f32 0.0, %v939
        %v941 = vpop.f32.mrb[0].mxu0
        %v942 = vpop.f32.mrb[0].mxu0
        %v943 = vadd.f32 0.0, %v942
        %v944 = vpop.f32.mrb[0].mxu0
        %945 = vmatprep.mubr.bf16.mxu0 0
        %946 = vmatmul.mubr.bf16.gmra.mrb[0].mxu0 %v869
        %v947 = vpop.f32.mrb[0].mxu0
        %v948 = vadd.f32 0.0, %v947
        %v949 = vpop.f32.mrb[0].mxu0
        %v950 = vpop.f32.mrb[0].mxu0
        %v951 = vadd.f32 0.0, %v950
        %v952 = vpop.f32.mrb[0].mxu0
        %953 = vmatprep.mubr.bf16.mxu0 0
        %954 = vmatmul.mubr.bf16.gmra.mrb[0].mxu0 %v872
        %v955 = vpop.f32.mrb[0].mxu0
        %v956 = vadd.f32 0.0, %v955
        %v957 = vpop.f32.mrb[0].mxu0
        %v958 = vpop.f32.mrb[0].mxu0
        %v959 = vadd.f32 0.0, %v958
        %v960 = vpop.f32.mrb[0].mxu0
        %961 = vmatprep.mubr.bf16.mxu0 0
        %962 = vmatmul.mubr.bf16.gmra.mrb[0].mxu0 %v875
        %v963 = vpop.f32.mrb[0].mxu0
        %v964 = vadd.f32 0.0, %v963
        %v965 = vpop.f32.mrb[0].mxu0
        %v966 = vpop.f32.mrb[0].mxu0
        %v967 = vadd.f32 0.0, %v966
        %v968 = vpop.f32.mrb[0].mxu0
        %969 = vmatprep.mubr.bf16.mxu0 0
        %970 = vmatmul.mubr.bf16.gmra.mrb[0].mxu0 %v878
        %v971 = vpop.f32.mrb[0].mxu0
        %v972 = vadd.f32 0.0, %v971
        %v973 = vpop.f32.mrb[0].mxu0
        %v974 = vpop.f32.mrb[0].mxu0
        %v975 = vadd.f32 0.0, %v974
        %v976 = vpop.f32.mrb[0].mxu0
        %977 = vmatprep.mubr.bf16.mxu0 0
        %978 = vmatmul.mubr.bf16.gmra.mrb[0].mxu0 %v881
        %v979 = vpop.f32.mrb[0].mxu0
        %v980 = vadd.f32 0.0, %v979
        %v981 = vpop.f32.mrb[0].mxu0
        %v982 = vpop.f32.mrb[0].mxu0
        %v983 = vadd.f32 0.0, %v982
        %v984 = vpop.f32.mrb[0].mxu0
        %985 = vmatprep.mubr.bf16.mxu0 0
        %986 = vmatmul.mubr.bf16.gmra.mrb[0].mxu0 %v884
        %v987 = vpop.f32.mrb[0].mxu0
        %v988 = vadd.f32 0.0, %v987
        %v989 = vpop.f32.mrb[0].mxu0
        %v990 = vpop.f32.mrb[0].mxu0
        %v991 = vadd.f32 0.0, %v990
        %v992 = vpop.f32.mrb[0].mxu0
        %993 = vdwg.mxu0
        %v994 = vadd.f32 %v753, %v924
        %v995 = vadd.f32 %v754, %v927
        %v996 = vadd.f32 %v755, %v932
        %v997 = vadd.f32 %v756, %v935
        %v998 = vadd.f32 %v757, %v940
        %v999 = vadd.f32 %v758, %v943
        %v1000 = vadd.f32 %v759, %v948
        %v1001 = vadd.f32 %v760, %v951
        %v1002 = vadd.f32 %v761, %v956
        %v1003 = vadd.f32 %v762, %v959
        %v1004 = vadd.f32 %v763, %v964
        %v1005 = vadd.f32 %v764, %v967
        %v1006 = vadd.f32 %v765, %v972
        %v1007 = vadd.f32 %v766, %v975
        %v1008 = vadd.f32 %v767, %v980
        %v1009 = vadd.f32 %v768, %v983
        %v1010 = vadd.f32 %v769, %v988
        %v1011 = vadd.f32 %v770, %v991
        %v1012 = vld [vmem:[%s179 + $0x50] sm:$0x3]
        %s1013 = scalar_lea.vmem %s1, 8
        %v1014 = vld [vmem:[%s1013] sm:$0x3]
        %v1016 = vunpack.c.l.b16 %v1012
        %v1017 = vpack.c.b16 %v1016, %v1016
        %vm1018 = vsmask.f32 6400
        %v1020 = vshrl.u32 %v830, 16
        %v1022 = vrot.slane %v1020, 1
        %v1023 = vshll.u32 %v830, 16
        %v1025 = vrot.slane %v1023, 2
        %v1026 = vor.u32 %v1022, %v1025
        %v1028 = vshrl.u32 %v831, 16
        %v1030 = vrot.slane %v1028, 1
        %v1031 = vshll.u32 %v831, 16
        %v1033 = vrot.slane %v1031, 2
        %v1034 = vor.u32 %v1030, %v1033
        %v1035 = vsel %vm1018, %v1026, %v1034
        %v1037 = vshrl.u32 %v832, 16
        %v1039 = vrot.slane %v1037, 1
        %v1040 = vshll.u32 %v832, 16
        %v1042 = vrot.slane %v1040, 2
        %v1043 = vor.u32 %v1039, %v1042
        %v1044 = vsel %vm1018, %v1034, %v1043
        %v1046 = vshrl.u32 %v833, 16
        %v1048 = vrot.slane %v1046, 1
        %v1049 = vshll.u32 %v833, 16
        %v1051 = vrot.slane %v1049, 2
        %v1052 = vor.u32 %v1048, %v1051
        %v1053 = vsel %vm1018, %v1043, %v1052
        %v1055 = vshrl.u32 %v834, 16
        %v1057 = vrot.slane %v1055, 1
        %v1058 = vshll.u32 %v834, 16
        %v1060 = vrot.slane %v1058, 2
        %v1061 = vor.u32 %v1057, %v1060
        %v1062 = vsel %vm1018, %v1052, %v1061
        %v1064 = vshrl.u32 %v835, 16
        %v1066 = vrot.slane %v1064, 1
        %v1067 = vshll.u32 %v835, 16
        %v1069 = vrot.slane %v1067, 2
        %v1070 = vor.u32 %v1066, %v1069
        %v1071 = vsel %vm1018, %v1061, %v1070
        %v1073 = vshrl.u32 %v836, 16
        %v1075 = vrot.slane %v1073, 1
        %v1076 = vshll.u32 %v836, 16
        %v1078 = vrot.slane %v1076, 2
        %v1079 = vor.u32 %v1075, %v1078
        %v1080 = vsel %vm1018, %v1070, %v1079
        %v1082 = vshrl.u32 %v837, 16
        %v1084 = vrot.slane %v1082, 1
        %v1085 = vshll.u32 %v837, 16
        %v1087 = vrot.slane %v1085, 2
        %v1088 = vor.u32 %v1084, %v1087
        %v1089 = vsel %vm1018, %v1079, %v1088
        %v1091 = vshrl.u32 %v838, 16
        %v1093 = vrot.slane %v1091, 1
        %v1094 = vshll.u32 %v838, 16
        %v1096 = vrot.slane %v1094, 2
        %v1097 = vor.u32 %v1093, %v1096
        %v1098 = vsel %vm1018, %v1088, %v1097
        %v1100 = vshrl.u32 %v1017, 16
        %v1102 = vrot.slane %v1100, 1
        %v1103 = vshll.u32 %v1017, 16
        %v1105 = vrot.slane %v1103, 2
        %v1106 = vor.u32 %v1102, %v1105
        %v1107 = vsel %vm1018, %v1097, %v1106
        %v1109 = vsel %vm329, %v1035, 0
        %v1112 = vsel %vm329, %v1044, 0
        %v1115 = vsel %vm329, %v1053, 0
        %v1118 = vsel %vm329, %v1062, 0
        %v1121 = vsel %vm329, %v1071, 0
        %v1124 = vsel %vm329, %v1080, 0
        %v1127 = vsel %vm329, %v1089, 0
        %v1130 = vsel %vm329, %v1098, 0
        %v1133 = vsel %vm329, %v1107, 0
        %v1136 = vsel %vm357, %v1014, 0
        %1138 = vmatprep.subr.bf16.mxu0 0
        %1139 = vmatpush1.bf16.msra.mxu0 %v1136
        %1140 = vmatprep.subr.bf16.mxu0 0
        %1141 = vmatpush1.bf16.msra.mxu0 0
        %1142 = vmatprep.subr.bf16.mxu0 0
        %1143 = vmatpush1.bf16.msra.mxu0 0
        %1144 = vmatprep.subr.bf16.mxu0 0
        %1145 = vmatpush1.bf16.msra.mxu0 0
        %1146 = vmatprep.subr.bf16.mxu0 0
        %1147 = vmatpush1.bf16.msra.mxu0 0
        %1148 = vmatprep.subr.bf16.mxu0 0
        %1149 = vmatpush1.bf16.msra.mxu0 0
        %1150 = vmatprep.subr.bf16.mxu0 0
        %1151 = vmatpush1.bf16.msra.mxu0 0
        %1152 = vmatprep.subr.bf16.mxu0 0
        %1153 = vmatpush1.bf16.msra.mxu0 0
        %1154 = vmatprep.subr.bf16.mxu0 0
        %1155 = vmatpush1.bf16.msra.mxu0 0
        %1156 = vmatprep.subr.bf16.mxu0 0
        %1157 = vmatpush1.bf16.msra.mxu0 0
        %1158 = vmatprep.subr.bf16.mxu0 0
        %1159 = vmatpush1.bf16.msra.mxu0 0
        %1160 = vmatprep.subr.bf16.mxu0 0
        %1161 = vmatpush1.bf16.msra.mxu0 0
        %1162 = vmatprep.subr.bf16.mxu0 0
        %1163 = vmatpush1.bf16.msra.mxu0 0
        %1164 = vmatprep.subr.bf16.mxu0 0
        %1165 = vmatpush1.bf16.msra.mxu0 0
        %1166 = vmatprep.subr.bf16.mxu0 0
        %1167 = vmatpush1.bf16.msra.mxu0 0
        %1168 = vmatprep.subr.bf16.mxu0 0
        %1169 = vmatpush1.bf16.msra.mxu0 0
        %1170 = vmatprep.mubr.bf16.mxu0 0
        %1171 = vmatmul.mubr.bf16.gmra.mrb[0].mxu0 %v1109
        %v1172 = vpop.f32.mrb[0].mxu0
        %v1173 = vadd.f32 0.0, %v1172
        %v1174 = vpop.f32.mrb[0].mxu0
        %v1175 = vpop.f32.mrb[0].mxu0
        %v1176 = vadd.f32 0.0, %v1175
        %v1177 = vpop.f32.mrb[0].mxu0
        %1178 = vmatprep.mubr.bf16.mxu0 0
        %1179 = vmatmul.mubr.bf16.gmra.mrb[0].mxu0 %v1112
        %v1180 = vpop.f32.mrb[0].mxu0
        %v1181 = vadd.f32 0.0, %v1180
        %v1182 = vpop.f32.mrb[0].mxu0
        %v1183 = vpop.f32.mrb[0].mxu0
        %v1184 = vadd.f32 0.0, %v1183
        %v1185 = vpop.f32.mrb[0].mxu0
        %1186 = vmatprep.mubr.bf16.mxu0 0
        %1187 = vmatmul.mubr.bf16.gmra.mrb[0].mxu0 %v1115
        %v1188 = vpop.f32.mrb[0].mxu0
        %v1189 = vadd.f32 0.0, %v1188
        %v1190 = vpop.f32.mrb[0].mxu0
        %v1191 = vpop.f32.mrb[0].mxu0
        %v1192 = vadd.f32 0.0, %v1191
        %v1193 = vpop.f32.mrb[0].mxu0
        %1194 = vmatprep.mubr.bf16.mxu0 0
        %1195 = vmatmul.mubr.bf16.gmra.mrb[0].mxu0 %v1118
        %v1196 = vpop.f32.mrb[0].mxu0
        %v1197 = vadd.f32 0.0, %v1196
        %v1198 = vpop.f32.mrb[0].mxu0
        %v1199 = vpop.f32.mrb[0].mxu0
        %v1200 = vadd.f32 0.0, %v1199
        %v1201 = vpop.f32.mrb[0].mxu0
        %1202 = vmatprep.mubr.bf16.mxu0 0
        %1203 = vmatmul.mubr.bf16.gmra.mrb[0].mxu0 %v1121
        %v1204 = vpop.f32.mrb[0].mxu0
        %v1205 = vadd.f32 0.0, %v1204
        %v1206 = vpop.f32.mrb[0].mxu0
        %v1207 = vpop.f32.mrb[0].mxu0
        %v1208 = vadd.f32 0.0, %v1207
        %v1209 = vpop.f32.mrb[0].mxu0
        %1210 = vmatprep.mubr.bf16.mxu0 0
        %1211 = vmatmul.mubr.bf16.gmra.mrb[0].mxu0 %v1124
        %v1212 = vpop.f32.mrb[0].mxu0
        %v1213 = vadd.f32 0.0, %v1212
        %v1214 = vpop.f32.mrb[0].mxu0
        %v1215 = vpop.f32.mrb[0].mxu0
        %v1216 = vadd.f32 0.0, %v1215
        %v1217 = vpop.f32.mrb[0].mxu0
        %1218 = vmatprep.mubr.bf16.mxu0 0
        %1219 = vmatmul.mubr.bf16.gmra.mrb[0].mxu0 %v1127
        %v1220 = vpop.f32.mrb[0].mxu0
        %v1221 = vadd.f32 0.0, %v1220
        %v1222 = vpop.f32.mrb[0].mxu0
        %v1223 = vpop.f32.mrb[0].mxu0
        %v1224 = vadd.f32 0.0, %v1223
        %v1225 = vpop.f32.mrb[0].mxu0
        %1226 = vmatprep.mubr.bf16.mxu0 0
        %1227 = vmatmul.mubr.bf16.gmra.mrb[0].mxu0 %v1130
        %v1228 = vpop.f32.mrb[0].mxu0
        %v1229 = vadd.f32 0.0, %v1228
        %v1230 = vpop.f32.mrb[0].mxu0
        %v1231 = vpop.f32.mrb[0].mxu0
        %v1232 = vadd.f32 0.0, %v1231
        %v1233 = vpop.f32.mrb[0].mxu0
        %1234 = vmatprep.mubr.bf16.mxu0 0
        %1235 = vmatmul.mubr.bf16.gmra.mrb[0].mxu0 %v1133
        %v1236 = vpop.f32.mrb[0].mxu0
        %v1237 = vadd.f32 0.0, %v1236
        %v1238 = vpop.f32.mrb[0].mxu0
        %v1239 = vpop.f32.mrb[0].mxu0
        %v1240 = vadd.f32 0.0, %v1239
        %v1241 = vpop.f32.mrb[0].mxu0
        %1242 = vdwg.mxu0
        %v1243 = vadd.f32 %v994, %v1173
        %v1244 = vadd.f32 %v995, %v1176
        %v1245 = vadd.f32 %v996, %v1181
        %v1246 = vadd.f32 %v997, %v1184
        %v1247 = vadd.f32 %v998, %v1189
        %v1248 = vadd.f32 %v999, %v1192
        %v1249 = vadd.f32 %v1000, %v1197
        %v1250 = vadd.f32 %v1001, %v1200
        %v1251 = vadd.f32 %v1002, %v1205
        %v1252 = vadd.f32 %v1003, %v1208
        %v1253 = vadd.f32 %v1004, %v1213
        %v1254 = vadd.f32 %v1005, %v1216
        %v1255 = vadd.f32 %v1006, %v1221
        %v1256 = vadd.f32 %v1007, %v1224
        %v1257 = vadd.f32 %v1008, %v1229
        %v1258 = vadd.f32 %v1009, %v1232
        %v1259 = vadd.f32 %v1010, %v1237
        %v1260 = vadd.f32 %v1011, %v1240
        %v1261 = vld [vmem:[%s179 + $0x8] sm:$0xc]
        %s1262 = scalar_lea.vmem %s1, 10
        %v1263 = vld [vmem:[%s1262] sm:$0x3]
        %v1265 = vunpack.c.l.b16 %v1261
        %v1266 = vpack.c.b16 %v812, %v1265
        %vm1267 = vcmask 1045504
        %v1268 = vrot.slane %v1266, 2
        %v1269 = vrot.slane %v831, 2
        %v1270 = vsel %vm1267, %v1268, %v1269
        %v1271 = vrot.slane %v832, 2
        %v1272 = vsel %vm1267, %v1269, %v1271
        %v1273 = vrot.slane %v833, 2
        %v1274 = vsel %vm1267, %v1271, %v1273
        %v1275 = vrot.slane %v834, 2
        %v1276 = vsel %vm1267, %v1273, %v1275
        %v1277 = vrot.slane %v835, 2
        %v1278 = vsel %vm1267, %v1275, %v1277
        %v1279 = vrot.slane %v836, 2
        %v1280 = vsel %vm1267, %v1277, %v1279
        %v1281 = vrot.slane %v837, 2
        %v1282 = vsel %vm1267, %v1279, %v1281
        %v1283 = vrot.slane %v838, 2
        %v1284 = vsel %vm1267, %v1281, %v1283
        %v1285 = vrot.slane %v1017, 2
        %v1286 = vsel %vm1267, %v1283, %v1285
        %v1288 = vsel %vm329, %v1270, 0
        %v1291 = vsel %vm329, %v1272, 0
        %v1294 = vsel %vm329, %v1274, 0
        %v1297 = vsel %vm329, %v1276, 0
        %v1300 = vsel %vm329, %v1278, 0
        %v1303 = vsel %vm329, %v1280, 0
        %v1306 = vsel %vm329, %v1282, 0
        %v1309 = vsel %vm329, %v1284, 0
        %v1312 = vsel %vm329, %v1286, 0
        %v1315 = vsel %vm357, %v1263, 0
        %1317 = vmatprep.subr.bf16.mxu0 0
        %1318 = vmatpush1.bf16.msra.mxu0 %v1315
        %1319 = vmatprep.subr.bf16.mxu0 0
        %1320 = vmatpush1.bf16.msra.mxu0 0
        %1321 = vmatprep.subr.bf16.mxu0 0
        %1322 = vmatpush1.bf16.msra.mxu0 0
        %1323 = vmatprep.subr.bf16.mxu0 0
        %1324 = vmatpush1.bf16.msra.mxu0 0
        %1325 = vmatprep.subr.bf16.mxu0 0
        %1326 = vmatpush1.bf16.msra.mxu0 0
        %1327 = vmatprep.subr.bf16.mxu0 0
        %1328 = vmatpush1.bf16.msra.mxu0 0
        %1329 = vmatprep.subr.bf16.mxu0 0
        %1330 = vmatpush1.bf16.msra.mxu0 0
        %1331 = vmatprep.subr.bf16.mxu0 0
        %1332 = vmatpush1.bf16.msra.mxu0 0
        %1333 = vmatprep.subr.bf16.mxu0 0
        %1334 = vmatpush1.bf16.msra.mxu0 0
        %1335 = vmatprep.subr.bf16.mxu0 0
        %1336 = vmatpush1.bf16.msra.mxu0 0
        %1337 = vmatprep.subr.bf16.mxu0 0
        %1338 = vmatpush1.bf16.msra.mxu0 0
        %1339 = vmatprep.subr.bf16.mxu0 0
        %1340 = vmatpush1.bf16.msra.mxu0 0
        %1341 = vmatprep.subr.bf16.mxu0 0
        %1342 = vmatpush1.bf16.msra.mxu0 0
        %1343 = vmatprep.subr.bf16.mxu0 0
        %1344 = vmatpush1.bf16.msra.mxu0 0
        %1345 = vmatprep.subr.bf16.mxu0 0
        %1346 = vmatpush1.bf16.msra.mxu0 0
        %1347 = vmatprep.subr.bf16.mxu0 0
        %1348 = vmatpush1.bf16.msra.mxu0 0
        %1349 = vmatprep.mubr.bf16.mxu0 0
        %1350 = vmatmul.mubr.bf16.gmra.mrb[0].mxu0 %v1288
        %v1351 = vpop.f32.mrb[0].mxu0
        %v1352 = vadd.f32 0.0, %v1351
        %v1353 = vpop.f32.mrb[0].mxu0
        %v1354 = vpop.f32.mrb[0].mxu0
        %v1355 = vadd.f32 0.0, %v1354
        %v1356 = vpop.f32.mrb[0].mxu0
        %1357 = vmatprep.mubr.bf16.mxu0 0
        %1358 = vmatmul.mubr.bf16.gmra.mrb[0].mxu0 %v1291
        %v1359 = vpop.f32.mrb[0].mxu0
        %v1360 = vadd.f32 0.0, %v1359
        %v1361 = vpop.f32.mrb[0].mxu0
        %v1362 = vpop.f32.mrb[0].mxu0
        %v1363 = vadd.f32 0.0, %v1362
        %v1364 = vpop.f32.mrb[0].mxu0
        %1365 = vmatprep.mubr.bf16.mxu0 0
        %1366 = vmatmul.mubr.bf16.gmra.mrb[0].mxu0 %v1294
        %v1367 = vpop.f32.mrb[0].mxu0
        %v1368 = vadd.f32 0.0, %v1367
        %v1369 = vpop.f32.mrb[0].mxu0
        %v1370 = vpop.f32.mrb[0].mxu0
        %v1371 = vadd.f32 0.0, %v1370
        %v1372 = vpop.f32.mrb[0].mxu0
        %1373 = vmatprep.mubr.bf16.mxu0 0
        %1374 = vmatmul.mubr.bf16.gmra.mrb[0].mxu0 %v1297
        %v1375 = vpop.f32.mrb[0].mxu0
        %v1376 = vadd.f32 0.0, %v1375
        %v1377 = vpop.f32.mrb[0].mxu0
        %v1378 = vpop.f32.mrb[0].mxu0
        %v1379 = vadd.f32 0.0, %v1378
        %v1380 = vpop.f32.mrb[0].mxu0
        %1381 = vmatprep.mubr.bf16.mxu0 0
        %1382 = vmatmul.mubr.bf16.gmra.mrb[0].mxu0 %v1300
        %v1383 = vpop.f32.mrb[0].mxu0
        %v1384 = vadd.f32 0.0, %v1383
        %v1385 = vpop.f32.mrb[0].mxu0
        %v1386 = vpop.f32.mrb[0].mxu0
        %v1387 = vadd.f32 0.0, %v1386
        %v1388 = vpop.f32.mrb[0].mxu0
        %1389 = vmatprep.mubr.bf16.mxu0 0
        %1390 = vmatmul.mubr.bf16.gmra.mrb[0].mxu0 %v1303
        %v1391 = vpop.f32.mrb[0].mxu0
        %v1392 = vadd.f32 0.0, %v1391
        %v1393 = vpop.f32.mrb[0].mxu0
        %v1394 = vpop.f32.mrb[0].mxu0
        %v1395 = vadd.f32 0.0, %v1394
        %v1396 = vpop.f32.mrb[0].mxu0
        %1397 = vmatprep.mubr.bf16.mxu0 0
        %1398 = vmatmul.mubr.bf16.gmra.mrb[0].mxu0 %v1306
        %v1399 = vpop.f32.mrb[0].mxu0
        %v1400 = vadd.f32 0.0, %v1399
        %v1401 = vpop.f32.mrb[0].mxu0
        %v1402 = vpop.f32.mrb[0].mxu0
        %v1403 = vadd.f32 0.0, %v1402
        %v1404 = vpop.f32.mrb[0].mxu0
        %1405 = vmatprep.mubr.bf16.mxu0 0
        %1406 = vmatmul.mubr.bf16.gmra.mrb[0].mxu0 %v1309
        %v1407 = vpop.f32.mrb[0].mxu0
        %v1408 = vadd.f32 0.0, %v1407
        %v1409 = vpop.f32.mrb[0].mxu0
        %v1410 = vpop.f32.mrb[0].mxu0
        %v1411 = vadd.f32 0.0, %v1410
        %v1412 = vpop.f32.mrb[0].mxu0
        %1413 = vmatprep.mubr.bf16.mxu0 0
        %1414 = vmatmul.mubr.bf16.gmra.mrb[0].mxu0 %v1312
        %v1415 = vpop.f32.mrb[0].mxu0
        %v1416 = vadd.f32 0.0, %v1415
        %v1417 = vpop.f32.mrb[0].mxu0
        %v1418 = vpop.f32.mrb[0].mxu0
        %v1419 = vadd.f32 0.0, %v1418
        %v1420 = vpop.f32.mrb[0].mxu0
        %1421 = vdwg.mxu0
        %v1422 = vadd.f32 %v1243, %v1352
        %v1423 = vadd.f32 %v1244, %v1355
        %v1424 = vadd.f32 %v1245, %v1360
        %v1425 = vadd.f32 %v1246, %v1363
        %v1426 = vadd.f32 %v1247, %v1368
        %v1427 = vadd.f32 %v1248, %v1371
        %v1428 = vadd.f32 %v1249, %v1376
        %v1429 = vadd.f32 %v1250, %v1379
        %v1430 = vadd.f32 %v1251, %v1384
        %v1431 = vadd.f32 %v1252, %v1387
        %v1432 = vadd.f32 %v1253, %v1392
        %v1433 = vadd.f32 %v1254, %v1395
        %v1434 = vadd.f32 %v1255, %v1400
        %v1435 = vadd.f32 %v1256, %v1403
        %v1436 = vadd.f32 %v1257, %v1408
        %v1437 = vadd.f32 %v1258, %v1411
        %v1438 = vadd.f32 %v1259, %v1416
        %v1439 = vadd.f32 %v1260, %v1419
        %v1440 = vld [vmem:[%s179 + $0x10] sm:$0xc]
        %v1441 = vld [vmem:[%s179 + $0x14] sm:$0xf]
        %v1442 = vld [vmem:[%s179 + $0x18] sm:$0xf]
        %v1443 = vld [vmem:[%s179 + $0x1c] sm:$0xf]
        %v1444 = vld [vmem:[%s179 + $0x20] sm:$0xf]
        %v1445 = vld [vmem:[%s179 + $0x24] sm:$0xf]
        %v1446 = vld [vmem:[%s179 + $0x28] sm:$0xf]
        %v1447 = vld [vmem:[%s179 + $0x2c] sm:$0xf]
        %v1448 = vld [vmem:[%s179 + $0x30] sm:$0xf]
        %v1449 = vld [vmem:[%s179 + $0x34] sm:$0xf]
        %v1450 = vld [vmem:[%s179 + $0x38] sm:$0xf]
        %v1451 = vld [vmem:[%s179 + $0x3c] sm:$0xf]
        %v1452 = vld [vmem:[%s179 + $0x40] sm:$0xf]
        %v1453 = vld [vmem:[%s179 + $0x44] sm:$0xf]
        %v1454 = vld [vmem:[%s179 + $0x48] sm:$0xf]
        %v1455 = vld [vmem:[%s179 + $0x4c] sm:$0xf]
        %v1456 = vld [vmem:[%s179 + $0x50] sm:$0xf]
        %v1457 = vld [vmem:[%s179 + $0x54] sm:$0xf]
        %v1458 = vld [vmem:[%s179 + $0x58] sm:$0x3]
        %s1459 = scalar_lea.vmem %s1, 12
        %v1460 = vld [vmem:[%s1459] sm:$0x3]
        %v1480 = vunpack.c.l.b16 %v1440
        %v1481 = vunpack.c.l.b16 %v1441
        %v1482 = vunpack.c.l.b16 %v1442
        %v1483 = vunpack.c.l.b16 %v1443
        %v1484 = vunpack.c.l.b16 %v1444
        %v1485 = vunpack.c.l.b16 %v1445
        %v1486 = vunpack.c.l.b16 %v1446
        %v1487 = vunpack.c.l.b16 %v1447
        %v1488 = vunpack.c.l.b16 %v1448
        %v1489 = vunpack.c.l.b16 %v1449
        %v1490 = vunpack.c.l.b16 %v1450
        %v1491 = vunpack.c.l.b16 %v1451
        %v1492 = vunpack.c.l.b16 %v1452
        %v1493 = vunpack.c.l.b16 %v1453
        %v1494 = vunpack.c.l.b16 %v1454
        %v1495 = vunpack.c.l.b16 %v1455
        %v1496 = vunpack.c.l.b16 %v1456
        %v1497 = vunpack.c.l.b16 %v1457
        %v1498 = vunpack.c.l.b16 %v1458
        %v1499 = vpack.c.b16 %v1481, %v1480
        %v1500 = vpack.c.b16 %v1483, %v1482
        %v1501 = vpack.c.b16 %v1485, %v1484
        %v1502 = vpack.c.b16 %v1487, %v1486
        %v1503 = vpack.c.b16 %v1489, %v1488
        %v1504 = vpack.c.b16 %v1491, %v1490
        %v1505 = vpack.c.b16 %v1493, %v1492
        %v1506 = vpack.c.b16 %v1495, %v1494
        %v1507 = vpack.c.b16 %v1497, %v1496
        %v1508 = vpack.c.b16 %v1498, %v1498
        %v1509 = vrot.slane %v1499, 2
        %v1510 = vrot.slane %v1500, 2
        %v1511 = vsel %vm1267, %v1509, %v1510
        %v1512 = vrot.slane %v1501, 2
        %v1513 = vsel %vm1267, %v1510, %v1512
        %v1514 = vrot.slane %v1502, 2
        %v1515 = vsel %vm1267, %v1512, %v1514
        %v1516 = vrot.slane %v1503, 2
        %v1517 = vsel %vm1267, %v1514, %v1516
        %v1518 = vrot.slane %v1504, 2
        %v1519 = vsel %vm1267, %v1516, %v1518
        %v1520 = vrot.slane %v1505, 2
        %v1521 = vsel %vm1267, %v1518, %v1520
        %v1522 = vrot.slane %v1506, 2
        %v1523 = vsel %vm1267, %v1520, %v1522
        %v1524 = vrot.slane %v1507, 2
        %v1525 = vsel %vm1267, %v1522, %v1524
        %v1526 = vrot.slane %v1508, 2
        %v1527 = vsel %vm1267, %v1524, %v1526
        %v1529 = vsel %vm329, %v1511, 0
        %v1532 = vsel %vm329, %v1513, 0
        %v1535 = vsel %vm329, %v1515, 0
        %v1538 = vsel %vm329, %v1517, 0
        %v1541 = vsel %vm329, %v1519, 0
        %v1544 = vsel %vm329, %v1521, 0
        %v1547 = vsel %vm329, %v1523, 0
        %v1550 = vsel %vm329, %v1525, 0
        %v1553 = vsel %vm329, %v1527, 0
        %v1556 = vsel %vm357, %v1460, 0
        %1558 = vmatprep.subr.bf16.mxu0 0
        %1559 = vmatpush1.bf16.msra.mxu0 %v1556
        %1560 = vmatprep.subr.bf16.mxu0 0
        %1561 = vmatpush1.bf16.msra.mxu0 0
        %1562 = vmatprep.subr.bf16.mxu0 0
        %1563 = vmatpush1.bf16.msra.mxu0 0
        %1564 = vmatprep.subr.bf16.mxu0 0
        %1565 = vmatpush1.bf16.msra.mxu0 0
        %1566 = vmatprep.subr.bf16.mxu0 0
        %1567 = vmatpush1.bf16.msra.mxu0 0
        %1568 = vmatprep.subr.bf16.mxu0 0
        %1569 = vmatpush1.bf16.msra.mxu0 0
        %1570 = vmatprep.subr.bf16.mxu0 0
        %1571 = vmatpush1.bf16.msra.mxu0 0
        %1572 = vmatprep.subr.bf16.mxu0 0
        %1573 = vmatpush1.bf16.msra.mxu0 0
        %1574 = vmatprep.subr.bf16.mxu0 0
        %1575 = vmatpush1.bf16.msra.mxu0 0
        %1576 = vmatprep.subr.bf16.mxu0 0
        %1577 = vmatpush1.bf16.msra.mxu0 0
        %1578 = vmatprep.subr.bf16.mxu0 0
        %1579 = vmatpush1.bf16.msra.mxu0 0
        %1580 = vmatprep.subr.bf16.mxu0 0
        %1581 = vmatpush1.bf16.msra.mxu0 0
        %1582 = vmatprep.subr.bf16.mxu0 0
        %1583 = vmatpush1.bf16.msra.mxu0 0
        %1584 = vmatprep.subr.bf16.mxu0 0
        %1585 = vmatpush1.bf16.msra.mxu0 0
        %1586 = vmatprep.subr.bf16.mxu0 0
        %1587 = vmatpush1.bf16.msra.mxu0 0
        %1588 = vmatprep.subr.bf16.mxu0 0
        %1589 = vmatpush1.bf16.msra.mxu0 0
        %1590 = vmatprep.mubr.bf16.mxu0 0
        %1591 = vmatmul.mubr.bf16.gmra.mrb[0].mxu0 %v1529
        %v1592 = vpop.f32.mrb[0].mxu0
        %v1593 = vadd.f32 0.0, %v1592
        %v1594 = vpop.f32.mrb[0].mxu0
        %v1595 = vpop.f32.mrb[0].mxu0
        %v1596 = vadd.f32 0.0, %v1595
        %v1597 = vpop.f32.mrb[0].mxu0
        %1598 = vmatprep.mubr.bf16.mxu0 0
        %1599 = vmatmul.mubr.bf16.gmra.mrb[0].mxu0 %v1532
        %v1600 = vpop.f32.mrb[0].mxu0
        %v1601 = vadd.f32 0.0, %v1600
        %v1602 = vpop.f32.mrb[0].mxu0
        %v1603 = vpop.f32.mrb[0].mxu0
        %v1604 = vadd.f32 0.0, %v1603
        %v1605 = vpop.f32.mrb[0].mxu0
        %1606 = vmatprep.mubr.bf16.mxu0 0
        %1607 = vmatmul.mubr.bf16.gmra.mrb[0].mxu0 %v1535
        %v1608 = vpop.f32.mrb[0].mxu0
        %v1609 = vadd.f32 0.0, %v1608
        %v1610 = vpop.f32.mrb[0].mxu0
        %v1611 = vpop.f32.mrb[0].mxu0
        %v1612 = vadd.f32 0.0, %v1611
        %v1613 = vpop.f32.mrb[0].mxu0
        %1614 = vmatprep.mubr.bf16.mxu0 0
        %1615 = vmatmul.mubr.bf16.gmra.mrb[0].mxu0 %v1538
        %v1616 = vpop.f32.mrb[0].mxu0
        %v1617 = vadd.f32 0.0, %v1616
        %v1618 = vpop.f32.mrb[0].mxu0
        %v1619 = vpop.f32.mrb[0].mxu0
        %v1620 = vadd.f32 0.0, %v1619
        %v1621 = vpop.f32.mrb[0].mxu0
        %1622 = vmatprep.mubr.bf16.mxu0 0
        %1623 = vmatmul.mubr.bf16.gmra.mrb[0].mxu0 %v1541
        %v1624 = vpop.f32.mrb[0].mxu0
        %v1625 = vadd.f32 0.0, %v1624
        %v1626 = vpop.f32.mrb[0].mxu0
        %v1627 = vpop.f32.mrb[0].mxu0
        %v1628 = vadd.f32 0.0, %v1627
        %v1629 = vpop.f32.mrb[0].mxu0
        %1630 = vmatprep.mubr.bf16.mxu0 0
        %1631 = vmatmul.mubr.bf16.gmra.mrb[0].mxu0 %v1544
        %v1632 = vpop.f32.mrb[0].mxu0
        %v1633 = vadd.f32 0.0, %v1632
        %v1634 = vpop.f32.mrb[0].mxu0
        %v1635 = vpop.f32.mrb[0].mxu0
        %v1636 = vadd.f32 0.0, %v1635
        %v1637 = vpop.f32.mrb[0].mxu0
        %1638 = vmatprep.mubr.bf16.mxu0 0
        %1639 = vmatmul.mubr.bf16.gmra.mrb[0].mxu0 %v1547
        %v1640 = vpop.f32.mrb[0].mxu0
        %v1641 = vadd.f32 0.0, %v1640
        %v1642 = vpop.f32.mrb[0].mxu0
        %v1643 = vpop.f32.mrb[0].mxu0
        %v1644 = vadd.f32 0.0, %v1643
        %v1645 = vpop.f32.mrb[0].mxu0
        %1646 = vmatprep.mubr.bf16.mxu0 0
        %1647 = vmatmul.mubr.bf16.gmra.mrb[0].mxu0 %v1550
        %v1648 = vpop.f32.mrb[0].mxu0
        %v1649 = vadd.f32 0.0, %v1648
        %v1650 = vpop.f32.mrb[0].mxu0
        %v1651 = vpop.f32.mrb[0].mxu0
        %v1652 = vadd.f32 0.0, %v1651
        %v1653 = vpop.f32.mrb[0].mxu0
        %1654 = vmatprep.mubr.bf16.mxu0 0
        %1655 = vmatmul.mubr.bf16.gmra.mrb[0].mxu0 %v1553
        %v1656 = vpop.f32.mrb[0].mxu0
        %v1657 = vadd.f32 0.0, %v1656
        %v1658 = vpop.f32.mrb[0].mxu0
        %v1659 = vpop.f32.mrb[0].mxu0
        %v1660 = vadd.f32 0.0, %v1659
        %v1661 = vpop.f32.mrb[0].mxu0
        %1662 = vdwg.mxu0
        %v1663 = vadd.f32 %v1422, %v1593
        %v1664 = vadd.f32 %v1423, %v1596
        %v1665 = vadd.f32 %v1424, %v1601
        %v1666 = vadd.f32 %v1425, %v1604
        %v1667 = vadd.f32 %v1426, %v1609
        %v1668 = vadd.f32 %v1427, %v1612
        %v1669 = vadd.f32 %v1428, %v1617
        %v1670 = vadd.f32 %v1429, %v1620
        %v1671 = vadd.f32 %v1430, %v1625
        %v1672 = vadd.f32 %v1431, %v1628
        %v1673 = vadd.f32 %v1432, %v1633
        %v1674 = vadd.f32 %v1433, %v1636
        %v1675 = vadd.f32 %v1434, %v1641
        %v1676 = vadd.f32 %v1435, %v1644
        %v1677 = vadd.f32 %v1436, %v1649
        %v1678 = vadd.f32 %v1437, %v1652
        %v1679 = vadd.f32 %v1438, %v1657
        %v1680 = vadd.f32 %v1439, %v1660
        %v1681 = vld [vmem:[%s179 + $0x58] sm:$0x7]
        %s1682 = scalar_lea.vmem %s1, 14
        %v1683 = vld [vmem:[%s1682] sm:$0x3]
        %v1685 = vunpack.c.l.b16 %v1681
        %v1686 = vpack.c.b16 %v1685, %v1685
        %vm1687 = vsmask.f32 5376
        %v1689 = vshrl.u32 %v1499, 16
        %v1691 = vrot.slane %v1689, 2
        %v1692 = vshll.u32 %v1499, 16
        %v1694 = vrot.slane %v1692, 3
        %v1695 = vor.u32 %v1691, %v1694
        %v1697 = vshrl.u32 %v1500, 16
        %v1699 = vrot.slane %v1697, 2
        %v1700 = vshll.u32 %v1500, 16
        %v1702 = vrot.slane %v1700, 3
        %v1703 = vor.u32 %v1699, %v1702
        %v1704 = vsel %vm1687, %v1695, %v1703
        %v1706 = vshrl.u32 %v1501, 16
        %v1708 = vrot.slane %v1706, 2
        %v1709 = vshll.u32 %v1501, 16
        %v1711 = vrot.slane %v1709, 3
        %v1712 = vor.u32 %v1708, %v1711
        %v1713 = vsel %vm1687, %v1703, %v1712
        %v1715 = vshrl.u32 %v1502, 16
        %v1717 = vrot.slane %v1715, 2
        %v1718 = vshll.u32 %v1502, 16
        %v1720 = vrot.slane %v1718, 3
        %v1721 = vor.u32 %v1717, %v1720
        %v1722 = vsel %vm1687, %v1712, %v1721
        %v1724 = vshrl.u32 %v1503, 16
        %v1726 = vrot.slane %v1724, 2
        %v1727 = vshll.u32 %v1503, 16
        %v1729 = vrot.slane %v1727, 3
        %v1730 = vor.u32 %v1726, %v1729
        %v1731 = vsel %vm1687, %v1721, %v1730
        %v1733 = vshrl.u32 %v1504, 16
        %v1735 = vrot.slane %v1733, 2
        %v1736 = vshll.u32 %v1504, 16
        %v1738 = vrot.slane %v1736, 3
        %v1739 = vor.u32 %v1735, %v1738
        %v1740 = vsel %vm1687, %v1730, %v1739
        %v1742 = vshrl.u32 %v1505, 16
        %v1744 = vrot.slane %v1742, 2
        %v1745 = vshll.u32 %v1505, 16
        %v1747 = vrot.slane %v1745, 3
        %v1748 = vor.u32 %v1744, %v1747
        %v1749 = vsel %vm1687, %v1739, %v1748
        %v1751 = vshrl.u32 %v1506, 16
        %v1753 = vrot.slane %v1751, 2
        %v1754 = vshll.u32 %v1506, 16
        %v1756 = vrot.slane %v1754, 3
        %v1757 = vor.u32 %v1753, %v1756
        %v1758 = vsel %vm1687, %v1748, %v1757
        %v1760 = vshrl.u32 %v1507, 16
        %v1762 = vrot.slane %v1760, 2
        %v1763 = vshll.u32 %v1507, 16
        %v1765 = vrot.slane %v1763, 3
        %v1766 = vor.u32 %v1762, %v1765
        %v1767 = vsel %vm1687, %v1757, %v1766
        %v1769 = vshrl.u32 %v1686, 16
        %v1771 = vrot.slane %v1769, 2
        %v1772 = vshll.u32 %v1686, 16
        %v1774 = vrot.slane %v1772, 3
        %v1775 = vor.u32 %v1771, %v1774
        %v1776 = vsel %vm1687, %v1766, %v1775
        %v1778 = vsel %vm329, %v1704, 0
        %v1781 = vsel %vm329, %v1713, 0
        %v1784 = vsel %vm329, %v1722, 0
        %v1787 = vsel %vm329, %v1731, 0
        %v1790 = vsel %vm329, %v1740, 0
        %v1793 = vsel %vm329, %v1749, 0
        %v1796 = vsel %vm329, %v1758, 0
        %v1799 = vsel %vm329, %v1767, 0
        %v1802 = vsel %vm329, %v1776, 0
        %v1805 = vsel %vm357, %v1683, 0
        %1807 = vmatprep.subr.bf16.mxu0 0
        %1808 = vmatpush1.bf16.msra.mxu0 %v1805
        %1809 = vmatprep.subr.bf16.mxu0 0
        %1810 = vmatpush1.bf16.msra.mxu0 0
        %1811 = vmatprep.subr.bf16.mxu0 0
        %1812 = vmatpush1.bf16.msra.mxu0 0
        %1813 = vmatprep.subr.bf16.mxu0 0
        %1814 = vmatpush1.bf16.msra.mxu0 0
        %1815 = vmatprep.subr.bf16.mxu0 0
        %1816 = vmatpush1.bf16.msra.mxu0 0
        %1817 = vmatprep.subr.bf16.mxu0 0
        %1818 = vmatpush1.bf16.msra.mxu0 0
        %1819 = vmatprep.subr.bf16.mxu0 0
        %1820 = vmatpush1.bf16.msra.mxu0 0
        %1821 = vmatprep.subr.bf16.mxu0 0
        %1822 = vmatpush1.bf16.msra.mxu0 0
        %1823 = vmatprep.subr.bf16.mxu0 0
        %1824 = vmatpush1.bf16.msra.mxu0 0
        %1825 = vmatprep.subr.bf16.mxu0 0
        %1826 = vmatpush1.bf16.msra.mxu0 0
        %1827 = vmatprep.subr.bf16.mxu0 0
        %1828 = vmatpush1.bf16.msra.mxu0 0
        %1829 = vmatprep.subr.bf16.mxu0 0
        %1830 = vmatpush1.bf16.msra.mxu0 0
        %1831 = vmatprep.subr.bf16.mxu0 0
        %1832 = vmatpush1.bf16.msra.mxu0 0
        %1833 = vmatprep.subr.bf16.mxu0 0
        %1834 = vmatpush1.bf16.msra.mxu0 0
        %1835 = vmatprep.subr.bf16.mxu0 0
        %1836 = vmatpush1.bf16.msra.mxu0 0
        %1837 = vmatprep.subr.bf16.mxu0 0
        %1838 = vmatpush1.bf16.msra.mxu0 0
        %1839 = vmatprep.mubr.bf16.mxu0 0
        %1840 = vmatmul.mubr.bf16.gmra.mrb[0].mxu0 %v1778
        %v1841 = vpop.f32.mrb[0].mxu0
        %v1842 = vadd.f32 0.0, %v1841
        %v1843 = vpop.f32.mrb[0].mxu0
        %v1844 = vpop.f32.mrb[0].mxu0
        %v1845 = vadd.f32 0.0, %v1844
        %v1846 = vpop.f32.mrb[0].mxu0
        %1847 = vmatprep.mubr.bf16.mxu0 0
        %1848 = vmatmul.mubr.bf16.gmra.mrb[0].mxu0 %v1781
        %v1849 = vpop.f32.mrb[0].mxu0
        %v1850 = vadd.f32 0.0, %v1849
        %v1851 = vpop.f32.mrb[0].mxu0
        %v1852 = vpop.f32.mrb[0].mxu0
        %v1853 = vadd.f32 0.0, %v1852
        %v1854 = vpop.f32.mrb[0].mxu0
        %1855 = vmatprep.mubr.bf16.mxu0 0
        %1856 = vmatmul.mubr.bf16.gmra.mrb[0].mxu0 %v1784
        %v1857 = vpop.f32.mrb[0].mxu0
        %v1858 = vadd.f32 0.0, %v1857
        %v1859 = vpop.f32.mrb[0].mxu0
        %v1860 = vpop.f32.mrb[0].mxu0
        %v1861 = vadd.f32 0.0, %v1860
        %v1862 = vpop.f32.mrb[0].mxu0
        %1863 = vmatprep.mubr.bf16.mxu0 0
        %1864 = vmatmul.mubr.bf16.gmra.mrb[0].mxu0 %v1787
        %v1865 = vpop.f32.mrb[0].mxu0
        %v1866 = vadd.f32 0.0, %v1865
        %v1867 = vpop.f32.mrb[0].mxu0
        %v1868 = vpop.f32.mrb[0].mxu0
        %v1869 = vadd.f32 0.0, %v1868
        %v1870 = vpop.f32.mrb[0].mxu0
        %1871 = vmatprep.mubr.bf16.mxu0 0
        %1872 = vmatmul.mubr.bf16.gmra.mrb[0].mxu0 %v1790
        %v1873 = vpop.f32.mrb[0].mxu0
        %v1874 = vadd.f32 0.0, %v1873
        %v1875 = vpop.f32.mrb[0].mxu0
        %v1876 = vpop.f32.mrb[0].mxu0
        %v1877 = vadd.f32 0.0, %v1876
        %v1878 = vpop.f32.mrb[0].mxu0
        %1879 = vmatprep.mubr.bf16.mxu0 0
        %1880 = vmatmul.mubr.bf16.gmra.mrb[0].mxu0 %v1793
        %v1881 = vpop.f32.mrb[0].mxu0
        %v1882 = vadd.f32 0.0, %v1881
        %v1883 = vpop.f32.mrb[0].mxu0
        %v1884 = vpop.f32.mrb[0].mxu0
        %v1885 = vadd.f32 0.0, %v1884
        %v1886 = vpop.f32.mrb[0].mxu0
        %1887 = vmatprep.mubr.bf16.mxu0 0
        %1888 = vmatmul.mubr.bf16.gmra.mrb[0].mxu0 %v1796
        %v1889 = vpop.f32.mrb[0].mxu0
        %v1890 = vadd.f32 0.0, %v1889
        %v1891 = vpop.f32.mrb[0].mxu0
        %v1892 = vpop.f32.mrb[0].mxu0
        %v1893 = vadd.f32 0.0, %v1892
        %v1894 = vpop.f32.mrb[0].mxu0
        %1895 = vmatprep.mubr.bf16.mxu0 0
        %1896 = vmatmul.mubr.bf16.gmra.mrb[0].mxu0 %v1799
        %v1897 = vpop.f32.mrb[0].mxu0
        %v1898 = vadd.f32 0.0, %v1897
        %v1899 = vpop.f32.mrb[0].mxu0
        %v1900 = vpop.f32.mrb[0].mxu0
        %v1901 = vadd.f32 0.0, %v1900
        %v1902 = vpop.f32.mrb[0].mxu0
        %1903 = vmatprep.mubr.bf16.mxu0 0
        %1904 = vmatmul.mubr.bf16.gmra.mrb[0].mxu0 %v1802
        %v1905 = vpop.f32.mrb[0].mxu0
        %v1906 = vadd.f32 0.0, %v1905
        %v1907 = vpop.f32.mrb[0].mxu0
        %v1908 = vpop.f32.mrb[0].mxu0
        %v1909 = vadd.f32 0.0, %v1908
        %v1910 = vpop.f32.mrb[0].mxu0
        %1911 = vdwg.mxu0
        %v1912 = vadd.f32 %v1663, %v1842
        %v1913 = vadd.f32 %v1664, %v1845
        %v1914 = vadd.f32 %v1665, %v1850
        %v1915 = vadd.f32 %v1666, %v1853
        %v1916 = vadd.f32 %v1667, %v1858
        %v1917 = vadd.f32 %v1668, %v1861
        %v1918 = vadd.f32 %v1669, %v1866
        %v1919 = vadd.f32 %v1670, %v1869
        %v1920 = vadd.f32 %v1671, %v1874
        %v1921 = vadd.f32 %v1672, %v1877
        %v1922 = vadd.f32 %v1673, %v1882
        %v1923 = vadd.f32 %v1674, %v1885
        %v1924 = vadd.f32 %v1675, %v1890
        %v1925 = vadd.f32 %v1676, %v1893
        %v1926 = vadd.f32 %v1677, %v1898
        %v1927 = vadd.f32 %v1678, %v1901
        %v1928 = vadd.f32 %v1679, %v1906
        %v1929 = vadd.f32 %v1680, %v1909
        %v1930 = vld [vmem:[%s179 + $0x10] sm:$0x8]
        %s1931 = scalar_lea.vmem %s1, 16
        %v1932 = vld [vmem:[%s1931] sm:$0x3]
        %v1934 = vunpack.c.l.b16 %v1930
        %v1935 = vpack.c.b16 %v1481, %v1934
        %vm1936 = vcmask 1044480
        %v1937 = vrot.slane %v1935, 3
        %v1938 = vrot.slane %v1500, 3
        %v1939 = vsel %vm1936, %v1937, %v1938
        %v1940 = vrot.slane %v1501, 3
        %v1941 = vsel %vm1936, %v1938, %v1940
        %v1942 = vrot.slane %v1502, 3
        %v1943 = vsel %vm1936, %v1940, %v1942
        %v1944 = vrot.slane %v1503, 3
        %v1945 = vsel %vm1936, %v1942, %v1944
        %v1946 = vrot.slane %v1504, 3
        %v1947 = vsel %vm1936, %v1944, %v1946
        %v1948 = vrot.slane %v1505, 3
        %v1949 = vsel %vm1936, %v1946, %v1948
        %v1950 = vrot.slane %v1506, 3
        %v1951 = vsel %vm1936, %v1948, %v1950
        %v1952 = vrot.slane %v1507, 3
        %v1953 = vsel %vm1936, %v1950, %v1952
        %v1954 = vrot.slane %v1686, 3
        %v1955 = vsel %vm1936, %v1952, %v1954
        %v1957 = vsel %vm329, %v1939, 0
        %v1960 = vsel %vm329, %v1941, 0
        %v1963 = vsel %vm329, %v1943, 0
        %v1966 = vsel %vm329, %v1945, 0
        %v1969 = vsel %vm329, %v1947, 0
        %v1972 = vsel %vm329, %v1949, 0
        %v1975 = vsel %vm329, %v1951, 0
        %v1978 = vsel %vm329, %v1953, 0
        %v1981 = vsel %vm329, %v1955, 0
        %v1984 = vsel %vm357, %v1932, 0
        %1986 = vmatprep.subr.bf16.mxu0 0
        %1987 = vmatpush1.bf16.msra.mxu0 %v1984
        %1988 = vmatprep.subr.bf16.mxu0 0
        %1989 = vmatpush1.bf16.msra.mxu0 0
        %1990 = vmatprep.subr.bf16.mxu0 0
        %1991 = vmatpush1.bf16.msra.mxu0 0
        %1992 = vmatprep.subr.bf16.mxu0 0
        %1993 = vmatpush1.bf16.msra.mxu0 0
        %1994 = vmatprep.subr.bf16.mxu0 0
        %1995 = vmatpush1.bf16.msra.mxu0 0
        %1996 = vmatprep.subr.bf16.mxu0 0
        %1997 = vmatpush1.bf16.msra.mxu0 0
        %1998 = vmatprep.subr.bf16.mxu0 0
        %1999 = vmatpush1.bf16.msra.mxu0 0
        %2000 = vmatprep.subr.bf16.mxu0 0
        %2001 = vmatpush1.bf16.msra.mxu0 0
        %2002 = vmatprep.subr.bf16.mxu0 0
        %2003 = vmatpush1.bf16.msra.mxu0 0
        %2004 = vmatprep.subr.bf16.mxu0 0
        %2005 = vmatpush1.bf16.msra.mxu0 0
        %2006 = vmatprep.subr.bf16.mxu0 0
        %2007 = vmatpush1.bf16.msra.mxu0 0
        %2008 = vmatprep.subr.bf16.mxu0 0
        %2009 = vmatpush1.bf16.msra.mxu0 0
        %2010 = vmatprep.subr.bf16.mxu0 0
        %2011 = vmatpush1.bf16.msra.mxu0 0
        %2012 = vmatprep.subr.bf16.mxu0 0
        %2013 = vmatpush1.bf16.msra.mxu0 0
        %2014 = vmatprep.subr.bf16.mxu0 0
        %2015 = vmatpush1.bf16.msra.mxu0 0
        %2016 = vmatprep.subr.bf16.mxu0 0
        %2017 = vmatpush1.bf16.msra.mxu0 0
        %2018 = vmatprep.mubr.bf16.mxu0 0
        %2019 = vmatmul.mubr.bf16.gmra.mrb[0].mxu0 %v1957
        %v2020 = vpop.f32.mrb[0].mxu0
        %v2021 = vadd.f32 0.0, %v2020
        %v2022 = vpop.f32.mrb[0].mxu0
        %v2023 = vpop.f32.mrb[0].mxu0
        %v2024 = vadd.f32 0.0, %v2023
        %v2025 = vpop.f32.mrb[0].mxu0
        %2026 = vmatprep.mubr.bf16.mxu0 0
        %2027 = vmatmul.mubr.bf16.gmra.mrb[0].mxu0 %v1960
        %v2028 = vpop.f32.mrb[0].mxu0
        %v2029 = vadd.f32 0.0, %v2028
        %v2030 = vpop.f32.mrb[0].mxu0
        %v2031 = vpop.f32.mrb[0].mxu0
        %v2032 = vadd.f32 0.0, %v2031
        %v2033 = vpop.f32.mrb[0].mxu0
        %2034 = vmatprep.mubr.bf16.mxu0 0
        %2035 = vmatmul.mubr.bf16.gmra.mrb[0].mxu0 %v1963
        %v2036 = vpop.f32.mrb[0].mxu0
        %v2037 = vadd.f32 0.0, %v2036
        %v2038 = vpop.f32.mrb[0].mxu0
        %v2039 = vpop.f32.mrb[0].mxu0
        %v2040 = vadd.f32 0.0, %v2039
        %v2041 = vpop.f32.mrb[0].mxu0
        %2042 = vmatprep.mubr.bf16.mxu0 0
        %2043 = vmatmul.mubr.bf16.gmra.mrb[0].mxu0 %v1966
        %v2044 = vpop.f32.mrb[0].mxu0
        %v2045 = vadd.f32 0.0, %v2044
        %v2046 = vpop.f32.mrb[0].mxu0
        %v2047 = vpop.f32.mrb[0].mxu0
        %v2048 = vadd.f32 0.0, %v2047
        %v2049 = vpop.f32.mrb[0].mxu0
        %2050 = vmatprep.mubr.bf16.mxu0 0
        %2051 = vmatmul.mubr.bf16.gmra.mrb[0].mxu0 %v1969
        %v2052 = vpop.f32.mrb[0].mxu0
        %v2053 = vadd.f32 0.0, %v2052
        %v2054 = vpop.f32.mrb[0].mxu0
        %v2055 = vpop.f32.mrb[0].mxu0
        %v2056 = vadd.f32 0.0, %v2055
        %v2057 = vpop.f32.mrb[0].mxu0
        %2058 = vmatprep.mubr.bf16.mxu0 0
        %2059 = vmatmul.mubr.bf16.gmra.mrb[0].mxu0 %v1972
        %v2060 = vpop.f32.mrb[0].mxu0
        %v2061 = vadd.f32 0.0, %v2060
        %v2062 = vpop.f32.mrb[0].mxu0
        %v2063 = vpop.f32.mrb[0].mxu0
        %v2064 = vadd.f32 0.0, %v2063
        %v2065 = vpop.f32.mrb[0].mxu0
        %2066 = vmatprep.mubr.bf16.mxu0 0
        %2067 = vmatmul.mubr.bf16.gmra.mrb[0].mxu0 %v1975
        %v2068 = vpop.f32.mrb[0].mxu0
        %v2069 = vadd.f32 0.0, %v2068
        %v2070 = vpop.f32.mrb[0].mxu0
        %v2071 = vpop.f32.mrb[0].mxu0
        %v2072 = vadd.f32 0.0, %v2071
        %v2073 = vpop.f32.mrb[0].mxu0
        %2074 = vmatprep.mubr.bf16.mxu0 0
        %2075 = vmatmul.mubr.bf16.gmra.mrb[0].mxu0 %v1978
        %v2076 = vpop.f32.mrb[0].mxu0
        %v2077 = vadd.f32 0.0, %v2076
        %v2078 = vpop.f32.mrb[0].mxu0
        %v2079 = vpop.f32.mrb[0].mxu0
        %v2080 = vadd.f32 0.0, %v2079
        %v2081 = vpop.f32.mrb[0].mxu0
        %2082 = vmatprep.mubr.bf16.mxu0 0
        %2083 = vmatmul.mubr.bf16.gmra.mrb[0].mxu0 %v1981
        %v2084 = vpop.f32.mrb[0].mxu0
        %v2085 = vadd.f32 0.0, %v2084
        %v2086 = vpop.f32.mrb[0].mxu0
        %v2087 = vpop.f32.mrb[0].mxu0
        %v2088 = vadd.f32 0.0, %v2087
        %v2089 = vpop.f32.mrb[0].mxu0
        %2090 = vdwg.mxu0
        %v2091 = vadd.f32 %v1912, %v2021
        %v2092 = vadd.f32 %v1913, %v2024
        %v2093 = vadd.f32 %v1914, %v2029
        %v2094 = vadd.f32 %v1915, %v2032
        %v2095 = vadd.f32 %v1916, %v2037
        %v2096 = vadd.f32 %v1917, %v2040
        %v2097 = vadd.f32 %v1918, %v2045
        %v2098 = vadd.f32 %v1919, %v2048
        %v2099 = vadd.f32 %v1920, %v2053
        %v2100 = vadd.f32 %v1921, %v2056
        %v2101 = vadd.f32 %v1922, %v2061
        %v2102 = vadd.f32 %v1923, %v2064
        %v2103 = vadd.f32 %v1924, %v2069
        %v2104 = vadd.f32 %v1925, %v2072
        %v2105 = vadd.f32 %v1926, %v2077
        %v2106 = vadd.f32 %v1927, %v2080
        %v2107 = vadd.f32 %v1928, %v2085
        %v2108 = vadd.f32 %v1929, %v2088
        %v2109 = vlaneseq
        %v2110 = vshrl.u32 %v2109, 7
        %v2111 = vadd.s32 %v2110, 8
        %v2112 = vadd.s32 %v2110, 16
        %v2113 = vadd.s32 %v2110, 24
        %v2114 = vadd.s32 %v2110, 32
        %v2115 = vadd.s32 %v2110, 40
        %v2116 = vadd.s32 %v2110, 48
        %v2117 = vadd.s32 %v2110, 56
        %v2118 = vadd.s32 %v2110, 64
        %v2119 = vadd.s32 %v2110, 72
        %v2120 = vadd.s32 %v2110, 80
        %v2121 = vadd.s32 %v2110, 88
        %v2122 = vadd.s32 %v2110, 96
        %v2123 = vadd.s32 %v2110, 104
        %v2124 = vadd.s32 %v2110, 112
        %v2125 = vadd.s32 %v2110, 120
        %v2126 = vadd.s32 %v2110, 128
        %v2127 = vadd.s32 %v2110, 136
        %vm2128 = vcmp.lt.s32.totalorder %v2110, 0
        %v2129 = vsub.s32 0, %v2110
        %v2130 = vsel %vm2128, %v2129, %v2110
        %v2131 = vmul.u32.u64.compose %v2130, 3817748708
        %v2132 = vextract.low.u32 %v2131
        %v2133 = vextract.high.u32 %v2131
        %v2134 = vshrl.u32 %v2133, 4
        %v2135 = vmul.u32 %v2134, 18
        %v2136 = vsub.s32 %v2130, %v2135
        %v2137 = vsub.s32 0, %v2136
        %v2138 = vsel %vm2128, %v2137, %v2136
        %vm2139 = vcmp.lt.s32.totalorder %v2111, 0
        %v2140 = vsub.s32 0, %v2111
        %v2141 = vsel %vm2139, %v2140, %v2111
        %v2142 = vmul.u32.u64.compose %v2141, 3817748708
        %v2143 = vextract.low.u32 %v2142
        %v2144 = vextract.high.u32 %v2142
        %v2145 = vshrl.u32 %v2144, 4
        %v2146 = vmul.u32 %v2145, 18
        %v2147 = vsub.s32 %v2141, %v2146
        %v2148 = vsub.s32 0, %v2147
        %v2149 = vsel %vm2139, %v2148, %v2147
        %vm2150 = vcmp.lt.s32.totalorder %v2112, 0
        %v2151 = vsub.s32 0, %v2112
        %v2152 = vsel %vm2150, %v2151, %v2112
        %v2153 = vmul.u32.u64.compose %v2152, 3817748708
        %v2154 = vextract.low.u32 %v2153
        %v2155 = vextract.high.u32 %v2153
        %v2156 = vshrl.u32 %v2155, 4
        %v2157 = vmul.u32 %v2156, 18
        %v2158 = vsub.s32 %v2152, %v2157
        %v2159 = vsub.s32 0, %v2158
        %v2160 = vsel %vm2150, %v2159, %v2158
        %vm2161 = vcmp.lt.s32.totalorder %v2113, 0
        %v2162 = vsub.s32 0, %v2113
        %v2163 = vsel %vm2161, %v2162, %v2113
        %v2164 = vmul.u32.u64.compose %v2163, 3817748708
        %v2165 = vextract.low.u32 %v2164
        %v2166 = vextract.high.u32 %v2164
        %v2167 = vshrl.u32 %v2166, 4
        %v2168 = vmul.u32 %v2167, 18
        %v2169 = vsub.s32 %v2163, %v2168
        %v2170 = vsub.s32 0, %v2169
        %v2171 = vsel %vm2161, %v2170, %v2169
        %vm2172 = vcmp.lt.s32.totalorder %v2114, 0
        %v2173 = vsub.s32 0, %v2114
        %v2174 = vsel %vm2172, %v2173, %v2114
        %v2175 = vmul.u32.u64.compose %v2174, 3817748708
        %v2176 = vextract.low.u32 %v2175
        %v2177 = vextract.high.u32 %v2175
        %v2178 = vshrl.u32 %v2177, 4
        %v2179 = vmul.u32 %v2178, 18
        %v2180 = vsub.s32 %v2174, %v2179
        %v2181 = vsub.s32 0, %v2180
        %v2182 = vsel %vm2172, %v2181, %v2180
        %vm2183 = vcmp.lt.s32.totalorder %v2115, 0
        %v2184 = vsub.s32 0, %v2115
        %v2185 = vsel %vm2183, %v2184, %v2115
        %v2186 = vmul.u32.u64.compose %v2185, 3817748708
        %v2187 = vextract.low.u32 %v2186
        %v2188 = vextract.high.u32 %v2186
        %v2189 = vshrl.u32 %v2188, 4
        %v2190 = vmul.u32 %v2189, 18
        %v2191 = vsub.s32 %v2185, %v2190
        %v2192 = vsub.s32 0, %v2191
        %v2193 = vsel %vm2183, %v2192, %v2191
        %vm2194 = vcmp.lt.s32.totalorder %v2116, 0
        %v2195 = vsub.s32 0, %v2116
        %v2196 = vsel %vm2194, %v2195, %v2116
        %v2197 = vmul.u32.u64.compose %v2196, 3817748708
        %v2198 = vextract.low.u32 %v2197
        %v2199 = vextract.high.u32 %v2197
        %v2200 = vshrl.u32 %v2199, 4
        %v2201 = vmul.u32 %v2200, 18
        %v2202 = vsub.s32 %v2196, %v2201
        %v2203 = vsub.s32 0, %v2202
        %v2204 = vsel %vm2194, %v2203, %v2202
        %vm2205 = vcmp.lt.s32.totalorder %v2117, 0
        %v2206 = vsub.s32 0, %v2117
        %v2207 = vsel %vm2205, %v2206, %v2117
        %v2208 = vmul.u32.u64.compose %v2207, 3817748708
        %v2209 = vextract.low.u32 %v2208
        %v2210 = vextract.high.u32 %v2208
        %v2211 = vshrl.u32 %v2210, 4
        %v2212 = vmul.u32 %v2211, 18
        %v2213 = vsub.s32 %v2207, %v2212
        %v2214 = vsub.s32 0, %v2213
        %v2215 = vsel %vm2205, %v2214, %v2213
        %vm2216 = vcmp.lt.s32.totalorder %v2118, 0
        %v2217 = vsub.s32 0, %v2118
        %v2218 = vsel %vm2216, %v2217, %v2118
        %v2219 = vmul.u32.u64.compose %v2218, 3817748708
        %v2220 = vextract.low.u32 %v2219
        %v2221 = vextract.high.u32 %v2219
        %v2222 = vshrl.u32 %v2221, 4
        %v2223 = vmul.u32 %v2222, 18
        %v2224 = vsub.s32 %v2218, %v2223
        %v2225 = vsub.s32 0, %v2224
        %v2226 = vsel %vm2216, %v2225, %v2224
        %vm2227 = vcmp.lt.s32.totalorder %v2119, 0
        %v2228 = vsub.s32 0, %v2119
        %v2229 = vsel %vm2227, %v2228, %v2119
        %v2230 = vmul.u32.u64.compose %v2229, 3817748708
        %v2231 = vextract.low.u32 %v2230
        %v2232 = vextract.high.u32 %v2230
        %v2233 = vshrl.u32 %v2232, 4
        %v2234 = vmul.u32 %v2233, 18
        %v2235 = vsub.s32 %v2229, %v2234
        %v2236 = vsub.s32 0, %v2235
        %v2237 = vsel %vm2227, %v2236, %v2235
        %vm2238 = vcmp.lt.s32.totalorder %v2120, 0
        %v2239 = vsub.s32 0, %v2120
        %v2240 = vsel %vm2238, %v2239, %v2120
        %v2241 = vmul.u32.u64.compose %v2240, 3817748708
        %v2242 = vextract.low.u32 %v2241
        %v2243 = vextract.high.u32 %v2241
        %v2244 = vshrl.u32 %v2243, 4
        %v2245 = vmul.u32 %v2244, 18
        %v2246 = vsub.s32 %v2240, %v2245
        %v2247 = vsub.s32 0, %v2246
        %v2248 = vsel %vm2238, %v2247, %v2246
        %vm2249 = vcmp.lt.s32.totalorder %v2121, 0
        %v2250 = vsub.s32 0, %v2121
        %v2251 = vsel %vm2249, %v2250, %v2121
        %v2252 = vmul.u32.u64.compose %v2251, 3817748708
        %v2253 = vextract.low.u32 %v2252
        %v2254 = vextract.high.u32 %v2252
        %v2255 = vshrl.u32 %v2254, 4
        %v2256 = vmul.u32 %v2255, 18
        %v2257 = vsub.s32 %v2251, %v2256
        %v2258 = vsub.s32 0, %v2257
        %v2259 = vsel %vm2249, %v2258, %v2257
        %vm2260 = vcmp.lt.s32.totalorder %v2122, 0
        %v2261 = vsub.s32 0, %v2122
        %v2262 = vsel %vm2260, %v2261, %v2122
        %v2263 = vmul.u32.u64.compose %v2262, 3817748708
        %v2264 = vextract.low.u32 %v2263
        %v2265 = vextract.high.u32 %v2263
        %v2266 = vshrl.u32 %v2265, 4
        %v2267 = vmul.u32 %v2266, 18
        %v2268 = vsub.s32 %v2262, %v2267
        %v2269 = vsub.s32 0, %v2268
        %v2270 = vsel %vm2260, %v2269, %v2268
        %vm2271 = vcmp.lt.s32.totalorder %v2123, 0
        %v2272 = vsub.s32 0, %v2123
        %v2273 = vsel %vm2271, %v2272, %v2123
        %v2274 = vmul.u32.u64.compose %v2273, 3817748708
        %v2275 = vextract.low.u32 %v2274
        %v2276 = vextract.high.u32 %v2274
        %v2277 = vshrl.u32 %v2276, 4
        %v2278 = vmul.u32 %v2277, 18
        %v2279 = vsub.s32 %v2273, %v2278
        %v2280 = vsub.s32 0, %v2279
        %v2281 = vsel %vm2271, %v2280, %v2279
        %vm2282 = vcmp.lt.s32.totalorder %v2124, 0
        %v2283 = vsub.s32 0, %v2124
        %v2284 = vsel %vm2282, %v2283, %v2124
        %v2285 = vmul.u32.u64.compose %v2284, 3817748708
        %v2286 = vextract.low.u32 %v2285
        %v2287 = vextract.high.u32 %v2285
        %v2288 = vshrl.u32 %v2287, 4
        %v2289 = vmul.u32 %v2288, 18
        %v2290 = vsub.s32 %v2284, %v2289
        %v2291 = vsub.s32 0, %v2290
        %v2292 = vsel %vm2282, %v2291, %v2290
        %vm2293 = vcmp.lt.s32.totalorder %v2125, 0
        %v2294 = vsub.s32 0, %v2125
        %v2295 = vsel %vm2293, %v2294, %v2125
        %v2296 = vmul.u32.u64.compose %v2295, 3817748708
        %v2297 = vextract.low.u32 %v2296
        %v2298 = vextract.high.u32 %v2296
        %v2299 = vshrl.u32 %v2298, 4
        %v2300 = vmul.u32 %v2299, 18
        %v2301 = vsub.s32 %v2295, %v2300
        %v2302 = vsub.s32 0, %v2301
        %v2303 = vsel %vm2293, %v2302, %v2301
        %vm2304 = vcmp.lt.s32.totalorder %v2126, 0
        %v2305 = vsub.s32 0, %v2126
        %v2306 = vsel %vm2304, %v2305, %v2126
        %v2307 = vmul.u32.u64.compose %v2306, 3817748708
        %v2308 = vextract.low.u32 %v2307
        %v2309 = vextract.high.u32 %v2307
        %v2310 = vshrl.u32 %v2309, 4
        %v2311 = vmul.u32 %v2310, 18
        %v2312 = vsub.s32 %v2306, %v2311
        %v2313 = vsub.s32 0, %v2312
        %v2314 = vsel %vm2304, %v2313, %v2312
        %vm2315 = vcmp.lt.s32.totalorder %v2127, 0
        %v2316 = vsub.s32 0, %v2127
        %v2317 = vsel %vm2315, %v2316, %v2127
        %v2318 = vmul.u32.u64.compose %v2317, 3817748708
        %v2319 = vextract.low.u32 %v2318
        %v2320 = vextract.high.u32 %v2318
        %v2321 = vshrl.u32 %v2320, 4
        %v2322 = vmul.u32 %v2321, 18
        %v2323 = vsub.s32 %v2317, %v2322
        %v2324 = vsub.s32 0, %v2323
        %v2325 = vsel %vm2315, %v2324, %v2323
        %vm2326 = vcmp.ne.s32.totalorder %v2138, 0
        %vm2327 = vcmp.ne.s32.totalorder %v2149, 0
        %vm2328 = vcmp.ne.s32.totalorder %v2160, 0
        %vm2329 = vcmp.ne.s32.totalorder %v2171, 0
        %vm2330 = vcmp.ne.s32.totalorder %v2182, 0
        %vm2331 = vcmp.ne.s32.totalorder %v2193, 0
        %vm2332 = vcmp.ne.s32.totalorder %v2204, 0
        %vm2333 = vcmp.ne.s32.totalorder %v2215, 0
        %vm2334 = vcmp.ne.s32.totalorder %v2226, 0
        %vm2335 = vcmp.ne.s32.totalorder %v2237, 0
        %vm2336 = vcmp.ne.s32.totalorder %v2248, 0
        %vm2337 = vcmp.ne.s32.totalorder %v2259, 0
        %vm2338 = vcmp.ne.s32.totalorder %v2270, 0
        %vm2339 = vcmp.ne.s32.totalorder %v2281, 0
        %vm2340 = vcmp.ne.s32.totalorder %v2292, 0
        %vm2341 = vcmp.ne.s32.totalorder %v2303, 0
        %vm2342 = vcmp.ne.s32.totalorder %v2314, 0
        %vm2343 = vcmp.ne.s32.totalorder %v2325, 0
        %vm2344 = vcmp.lt.s32.totalorder %v2138, 0
        %vm2345 = vcmp.lt.s32.totalorder %v2149, 0
        %vm2346 = vcmp.lt.s32.totalorder %v2160, 0
        %vm2347 = vcmp.lt.s32.totalorder %v2171, 0
        %vm2348 = vcmp.lt.s32.totalorder %v2182, 0
        %vm2349 = vcmp.lt.s32.totalorder %v2193, 0
        %vm2350 = vcmp.lt.s32.totalorder %v2204, 0
        %vm2351 = vcmp.lt.s32.totalorder %v2215, 0
        %vm2352 = vcmp.lt.s32.totalorder %v2226, 0
        %vm2353 = vcmp.lt.s32.totalorder %v2237, 0
        %vm2354 = vcmp.lt.s32.totalorder %v2248, 0
        %vm2355 = vcmp.lt.s32.totalorder %v2259, 0
        %vm2356 = vcmp.lt.s32.totalorder %v2270, 0
        %vm2357 = vcmp.lt.s32.totalorder %v2281, 0
        %vm2358 = vcmp.lt.s32.totalorder %v2292, 0
        %vm2359 = vcmp.lt.s32.totalorder %v2303, 0
        %vm2360 = vcmp.lt.s32.totalorder %v2314, 0
        %vm2361 = vcmp.lt.s32.totalorder %v2325, 0
        %vm2362 = vmand %vm2344, %vm2326
        %vm2363 = vmand %vm2345, %vm2327
        %vm2364 = vmand %vm2346, %vm2328
        %vm2365 = vmand %vm2347, %vm2329
        %vm2366 = vmand %vm2348, %vm2330
        %vm2367 = vmand %vm2349, %vm2331
        %vm2368 = vmand %vm2350, %vm2332
        %vm2369 = vmand %vm2351, %vm2333
        %vm2370 = vmand %vm2352, %vm2334
        %vm2371 = vmand %vm2353, %vm2335
        %vm2372 = vmand %vm2354, %vm2336
        %vm2373 = vmand %vm2355, %vm2337
        %vm2374 = vmand %vm2356, %vm2338
        %vm2375 = vmand %vm2357, %vm2339
        %vm2376 = vmand %vm2358, %vm2340
        %vm2377 = vmand %vm2359, %vm2341
        %vm2378 = vmand %vm2360, %vm2342
        %vm2379 = vmand %vm2361, %vm2343
        %v2380 = vadd.s32 %v2138, 18
        %v2381 = vadd.s32 %v2149, 18
        %v2382 = vadd.s32 %v2160, 18
        %v2383 = vadd.s32 %v2171, 18
        %v2384 = vadd.s32 %v2182, 18
        %v2385 = vadd.s32 %v2193, 18
        %v2386 = vadd.s32 %v2204, 18
        %v2387 = vadd.s32 %v2215, 18
        %v2388 = vadd.s32 %v2226, 18
        %v2389 = vadd.s32 %v2237, 18
        %v2390 = vadd.s32 %v2248, 18
        %v2391 = vadd.s32 %v2259, 18
        %v2392 = vadd.s32 %v2270, 18
        %v2393 = vadd.s32 %v2281, 18
        %v2394 = vadd.s32 %v2292, 18
        %v2395 = vadd.s32 %v2303, 18
        %v2396 = vadd.s32 %v2314, 18
        %v2397 = vadd.s32 %v2325, 18
        %v2398 = vsel %vm2362, %v2380, %v2138
        %v2399 = vsel %vm2363, %v2381, %v2149
        %v2400 = vsel %vm2364, %v2382, %v2160
        %v2401 = vsel %vm2365, %v2383, %v2171
        %v2402 = vsel %vm2366, %v2384, %v2182
        %v2403 = vsel %vm2367, %v2385, %v2193
        %v2404 = vsel %vm2368, %v2386, %v2204
        %v2405 = vsel %vm2369, %v2387, %v2215
        %v2406 = vsel %vm2370, %v2388, %v2226
        %v2407 = vsel %vm2371, %v2389, %v2237
        %v2408 = vsel %vm2372, %v2390, %v2248
        %v2409 = vsel %vm2373, %v2391, %v2259
        %v2410 = vsel %vm2374, %v2392, %v2270
        %v2411 = vsel %vm2375, %v2393, %v2281
        %v2412 = vsel %vm2376, %v2394, %v2292
        %v2413 = vsel %vm2377, %v2395, %v2303
        %v2414 = vsel %vm2378, %v2396, %v2314
        %v2415 = vsel %vm2379, %v2397, %v2325
        %vm2416 = vcmp.lt.s32.totalorder %v2398, 16
        %vm2417 = vcmp.lt.s32.totalorder %v2399, 16
        %vm2418 = vcmp.lt.s32.totalorder %v2400, 16
        %vm2419 = vcmp.lt.s32.totalorder %v2401, 16
        %vm2420 = vcmp.lt.s32.totalorder %v2402, 16
        %vm2421 = vcmp.lt.s32.totalorder %v2403, 16
        %vm2422 = vcmp.lt.s32.totalorder %v2404, 16
        %vm2423 = vcmp.lt.s32.totalorder %v2405, 16
        %vm2424 = vcmp.lt.s32.totalorder %v2406, 16
        %vm2425 = vcmp.lt.s32.totalorder %v2407, 16
        %vm2426 = vcmp.lt.s32.totalorder %v2408, 16
        %vm2427 = vcmp.lt.s32.totalorder %v2409, 16
        %vm2428 = vcmp.lt.s32.totalorder %v2410, 16
        %vm2429 = vcmp.lt.s32.totalorder %v2411, 16
        %vm2430 = vcmp.lt.s32.totalorder %v2412, 16
        %vm2431 = vcmp.lt.s32.totalorder %v2413, 16
        %vm2432 = vcmp.lt.s32.totalorder %v2414, 16
        %vm2433 = vcmp.lt.s32.totalorder %v2415, 16
        %v2434 = vsel %vm2416, 1, 0
        %v2435 = vsel %vm2417, 1, 0
        %v2436 = vsel %vm2418, 1, 0
        %v2437 = vsel %vm2419, 1, 0
        %v2438 = vsel %vm2420, 1, 0
        %v2439 = vsel %vm2421, 1, 0
        %v2440 = vsel %vm2422, 1, 0
        %v2441 = vsel %vm2423, 1, 0
        %v2442 = vsel %vm2424, 1, 0
        %v2443 = vsel %vm2425, 1, 0
        %v2444 = vsel %vm2426, 1, 0
        %v2445 = vsel %vm2427, 1, 0
        %v2446 = vsel %vm2428, 1, 0
        %v2447 = vsel %vm2429, 1, 0
        %v2448 = vsel %vm2430, 1, 0
        %v2449 = vsel %vm2431, 1, 0
        %v2450 = vsel %vm2432, 1, 0
        %v2451 = vsel %vm2433, 1, 0
        %vm2452 = vcmp.eq.s32.totalorder %v2434, 1
        %vm2453 = vcmp.eq.s32.totalorder %v2435, 1
        %vm2454 = vcmp.eq.s32.totalorder %v2436, 1
        %vm2455 = vcmp.eq.s32.totalorder %v2437, 1
        %vm2456 = vcmp.eq.s32.totalorder %v2438, 1
        %vm2457 = vcmp.eq.s32.totalorder %v2439, 1
        %vm2458 = vcmp.eq.s32.totalorder %v2440, 1
        %vm2459 = vcmp.eq.s32.totalorder %v2441, 1
        %vm2460 = vcmp.eq.s32.totalorder %v2442, 1
        %vm2461 = vcmp.eq.s32.totalorder %v2443, 1
        %vm2462 = vcmp.eq.s32.totalorder %v2444, 1
        %vm2463 = vcmp.eq.s32.totalorder %v2445, 1
        %vm2464 = vcmp.eq.s32.totalorder %v2446, 1
        %vm2465 = vcmp.eq.s32.totalorder %v2447, 1
        %vm2466 = vcmp.eq.s32.totalorder %v2448, 1
        %vm2467 = vcmp.eq.s32.totalorder %v2449, 1
        %vm2468 = vcmp.eq.s32.totalorder %v2450, 1
        %vm2469 = vcmp.eq.s32.totalorder %v2451, 1
        %v2470 = vsel %vm2452, %v2091, 0.0
        %v2471 = vsel %vm2453, %v2092, 0.0
        %v2472 = vsel %vm2454, %v2093, 0.0
        %v2473 = vsel %vm2455, %v2094, 0.0
        %v2474 = vsel %vm2456, %v2095, 0.0
        %v2475 = vsel %vm2457, %v2096, 0.0
        %v2476 = vsel %vm2458, %v2097, 0.0
        %v2477 = vsel %vm2459, %v2098, 0.0
        %v2478 = vsel %vm2460, %v2099, 0.0
        %v2479 = vsel %vm2461, %v2100, 0.0
        %v2480 = vsel %vm2462, %v2101, 0.0
        %v2481 = vsel %vm2463, %v2102, 0.0
        %v2482 = vsel %vm2464, %v2103, 0.0
        %v2483 = vsel %vm2465, %v2104, 0.0
        %v2484 = vsel %vm2466, %v2105, 0.0
        %v2485 = vsel %vm2467, %v2106, 0.0
        %v2486 = vsel %vm2468, %v2107, 0.0
        %v2487 = vsel %vm2469, %v2108, 0.0
        %v2488 = vadd.f32 %v2470, %v2471
        %v2489 = vadd.f32 %v2488, %v2472
        %v2490 = vadd.f32 %v2489, %v2473
        %v2491 = vadd.f32 %v2490, %v2474
        %v2492 = vadd.f32 %v2491, %v2475
        %v2493 = vadd.f32 %v2492, %v2476
        %v2494 = vadd.f32 %v2493, %v2477
        %v2495 = vadd.f32 %v2494, %v2478
        %v2496 = vadd.f32 %v2495, %v2479
        %v2497 = vadd.f32 %v2496, %v2480
        %v2498 = vadd.f32 %v2497, %v2481
        %v2499 = vadd.f32 %v2498, %v2482
        %v2500 = vadd.f32 %v2499, %v2483
        %v2501 = vadd.f32 %v2500, %v2484
        %v2502 = vadd.f32 %v2501, %v2485
        %v2503 = vadd.f32 %v2502, %v2486
        %v2504 = vadd.f32 %v2503, %v2487
        %v2505 = vrot.slane %v2504, 4
        %v2506 = vadd.f32 %v2504, %v2505
        %v2507 = vrot.slane %v2506, 2
        %v2508 = vadd.f32 %v2506, %v2507
        %v2509 = vrot.slane %v2508, 1
        %v2510 = vadd.f32 %v2508, %v2509
        %2511 = vst [vmem:[%s174] sm:$0x1] %v2510
        %v2512 = vmul.f32 %v2470, %v2470
        %v2513 = vmul.f32 %v2471, %v2471
        %v2514 = vmul.f32 %v2472, %v2472
        %v2515 = vmul.f32 %v2473, %v2473
        %v2516 = vmul.f32 %v2474, %v2474
        %v2517 = vmul.f32 %v2475, %v2475
        %v2518 = vmul.f32 %v2476, %v2476
        %v2519 = vmul.f32 %v2477, %v2477
        %v2520 = vmul.f32 %v2478, %v2478
        %v2521 = vmul.f32 %v2479, %v2479
        %v2522 = vmul.f32 %v2480, %v2480
        %v2523 = vmul.f32 %v2481, %v2481
        %v2524 = vmul.f32 %v2482, %v2482
        %v2525 = vmul.f32 %v2483, %v2483
        %v2526 = vmul.f32 %v2484, %v2484
        %v2527 = vmul.f32 %v2485, %v2485
        %v2528 = vmul.f32 %v2486, %v2486
        %v2529 = vmul.f32 %v2487, %v2487
        %v2530 = vadd.f32 %v2512, %v2513
        %v2531 = vadd.f32 %v2530, %v2514
        %v2532 = vadd.f32 %v2531, %v2515
        %v2533 = vadd.f32 %v2532, %v2516
        %v2534 = vadd.f32 %v2533, %v2517
        %v2535 = vadd.f32 %v2534, %v2518
        %v2536 = vadd.f32 %v2535, %v2519
        %v2537 = vadd.f32 %v2536, %v2520
        %v2538 = vadd.f32 %v2537, %v2521
        %v2539 = vadd.f32 %v2538, %v2522
        %v2540 = vadd.f32 %v2539, %v2523
        %v2541 = vadd.f32 %v2540, %v2524
        %v2542 = vadd.f32 %v2541, %v2525
        %v2543 = vadd.f32 %v2542, %v2526
        %v2544 = vadd.f32 %v2543, %v2527
        %v2545 = vadd.f32 %v2544, %v2528
        %v2546 = vadd.f32 %v2545, %v2529
        %v2547 = vrot.slane %v2546, 4
        %v2548 = vadd.f32 %v2546, %v2547
        %v2549 = vrot.slane %v2548, 2
        %v2550 = vadd.f32 %v2548, %v2549
        %v2551 = vrot.slane %v2550, 1
        %v2552 = vadd.f32 %v2550, %v2551
        %2553 = vst [vmem:[%s174 + $0x1] sm:$0x1] %v2552
        %v2554 = vpack.c.bf16 %v2471, %v2470
        %v2555 = vpack.c.bf16 %v2473, %v2472
        %v2556 = vpack.c.bf16 %v2475, %v2474
        %v2557 = vpack.c.bf16 %v2477, %v2476
        %v2558 = vpack.c.bf16 %v2479, %v2478
        %v2559 = vpack.c.bf16 %v2481, %v2480
        %v2560 = vpack.c.bf16 %v2483, %v2482
        %v2561 = vpack.c.bf16 %v2485, %v2484
        %v2562 = vpack.c.bf16 %v2487, %v2486
        %v2572 = vunpack.c.l.b16 %v2554
        %v2573 = vunpack.c.h.b16 %v2554
        %v2574 = vunpack.c.l.b16 %v2555
        %v2575 = vunpack.c.h.b16 %v2555
        %v2576 = vunpack.c.l.b16 %v2556
        %v2577 = vunpack.c.h.b16 %v2556
        %v2578 = vunpack.c.l.b16 %v2557
        %v2579 = vunpack.c.h.b16 %v2557
        %v2580 = vunpack.c.l.b16 %v2558
        %v2581 = vunpack.c.h.b16 %v2558
        %v2582 = vunpack.c.l.b16 %v2559
        %v2583 = vunpack.c.h.b16 %v2559
        %v2584 = vunpack.c.l.b16 %v2560
        %v2585 = vunpack.c.h.b16 %v2560
        %v2586 = vunpack.c.l.b16 %v2561
        %v2587 = vunpack.c.h.b16 %v2561
        %v2588 = vunpack.c.l.b16 %v2562
        %v2589 = vunpack.c.h.b16 %v2562
        %v2590 = vpack.c.b16 %v2572, %v2572
        %v2591 = vpack.c.b16 %v2573, %v2573
        %v2592 = vpack.c.b16 %v2574, %v2574
        %v2593 = vpack.c.b16 %v2575, %v2575
        %v2594 = vpack.c.b16 %v2576, %v2576
        %v2595 = vpack.c.b16 %v2577, %v2577
        %v2596 = vpack.c.b16 %v2578, %v2578
        %v2597 = vpack.c.b16 %v2579, %v2579
        %v2598 = vpack.c.b16 %v2580, %v2580
        %v2599 = vpack.c.b16 %v2581, %v2581
        %v2600 = vpack.c.b16 %v2582, %v2582
        %v2601 = vpack.c.b16 %v2583, %v2583
        %v2602 = vpack.c.b16 %v2584, %v2584
        %v2603 = vpack.c.b16 %v2585, %v2585
        %v2604 = vpack.c.b16 %v2586, %v2586
        %v2605 = vpack.c.b16 %v2587, %v2587
        %v2606 = vpack.c.b16 %v2588, %v2588
        %v2607 = vpack.c.b16 %v2589, %v2589
        %2626 = vst [vmem:[%s167] sm:$0xf] %v2590
        %2627 = vst [vmem:[%s167 + $0x4] sm:$0xf] %v2591
        %2628 = vst [vmem:[%s167 + $0x8] sm:$0xf] %v2592
        %2629 = vst [vmem:[%s167 + $0xc] sm:$0xf] %v2593
        %2630 = vst [vmem:[%s167 + $0x10] sm:$0xf] %v2594
        %2631 = vst [vmem:[%s167 + $0x14] sm:$0xf] %v2595
        %2632 = vst [vmem:[%s167 + $0x18] sm:$0xf] %v2596
        %2633 = vst [vmem:[%s167 + $0x1c] sm:$0xf] %v2597
        %2634 = vst [vmem:[%s167 + $0x20] sm:$0xf] %v2598
        %2635 = vst [vmem:[%s167 + $0x24] sm:$0xf] %v2599
        %2636 = vst [vmem:[%s167 + $0x28] sm:$0xf] %v2600
        %2637 = vst [vmem:[%s167 + $0x2c] sm:$0xf] %v2601
        %2638 = vst [vmem:[%s167 + $0x30] sm:$0xf] %v2602
        %2639 = vst [vmem:[%s167 + $0x34] sm:$0xf] %v2603
        %2640 = vst [vmem:[%s167 + $0x38] sm:$0xf] %v2604
        %2641 = vst [vmem:[%s167 + $0x3c] sm:$0xf] %v2605
        %2642 = vst [vmem:[%s167 + $0x40] sm:$0xf] %v2606
        %2643 = vst [vmem:[%s167 + $0x44] sm:$0xf] %v2607
        %s2644 = sand.u32 %s76, 1
        %s2645 = scalar_lea.sflag [#allocation3], %s2644
        %s2646 = sand.u32 %s76, 1
        %s2647 = smul.addr %s2646, 72
        %s2648 = scalar_lea.vmem [#allocation2], %s2647
        %s2649 = sand.u32 %s102, 1
        %s2650 = scalar_lea.sflag [#allocation5], %s2649
        %s2651 = sand.u32 %s102, 1
        %s2652 = smul.addr %s2651, 8
        %s2653 = scalar_lea.vmem [#allocation4], %s2652
        // Predicated region
        $region29: #{tpu_custom_call.1} parent=27 // pred_check
          %p2654 = pneg %p86
        $region30: #{tpu_custom_call.1} parent=27 // pred_check_branch
          %2656 = sbr.rel (%p2654) target = $region32
        $region31: #{tpu_custom_call.1} parent=27 // pred_region
          %s2657 = smul.u32 18, %s21
          %s2659 = ssub.s32 1152, 1152
          %2660 = vsyncadd %s2645, %s2659
          %s2661 = smul.addr %s2657, 64
          %s2662 = scalar_lea.hbm %s2, %s2661
          %s2663 = sshll.u32 %s2648, 4
          %s2664 = int_to_ptr.vmem [resolvable:$true] %s2663
          %2669 = dma.vmem_to_hbm [thread:$0]  %s2664, 1152, %s2662, %s2645, 64, 64, 4
        $region32: #{tpu_custom_call.1} parent=27 // pred_fallthru
          _
        // Predicated region
        $region33: #{tpu_custom_call.1} parent=27 // pred_check
          %p2670 = pneg %p112
        $region34: #{tpu_custom_call.1} parent=27 // pred_check_branch
          %2672 = sbr.rel (%p2670) target = $region36
        $region35: #{tpu_custom_call.1} parent=27 // pred_region
          %s2674 = ssub.s32 128, 128
          %2675 = vsyncadd %s2650, %s2674
          %s2676 = smul.addr %s21, 128
          %s2677 = scalar_lea.hbm %s3, %s2676
          %s2679 = sshll.u32 %s2653, 4
          %s2680 = int_to_ptr.vmem [resolvable:$true] %s2679
          %2682 = dma.vmem_to_hbm [thread:$0]  %s2680, 128, %s2677, %s2650
        $region36: #{tpu_custom_call.1} parent=27 // pred_fallthru
          _
      $region28: #{tpu_custom_call.1} parent=5 // pred_fallthru
        _
      %p2683 = scmp.le.s32.totalorder 2, %s16
      // Predicated region
      $region37: #{tpu_custom_call.1} parent=5 // pred_check
        %p2684 = pneg %p2683
      $region38: #{tpu_custom_call.1} parent=5 // pred_check_branch
        %2686 = sbr.rel (%p2684) target = $region40
      $region39: #{tpu_custom_call.1} parent=5 // pred_region
        %s2687 = ssub.s32 %s16, 2
        // Predicated region
        $region41: #{tpu_custom_call.1} parent=39 // pred_check
          %p2688 = pneg %p92
        $region42: #{tpu_custom_call.1} parent=39 // pred_check_branch
          %2690 = sbr.rel (%p2688) target = $region44
        $region43: #{tpu_custom_call.1} parent=39 // pred_region
          %s2691 = sand.u32 %s77, 1
          %s2692 = scalar_lea.sflag [#allocation3], %s2691
          %s2693 = sand.u32 %s77, 1
          %s2694 = smul.addr %s2693, 72
          %s2695 = scalar_lea.vmem [#allocation2], %s2694
          %2696 = dma.done %s2692, 1152
        $region44: #{tpu_custom_call.1} parent=39 // pred_fallthru
          _
        // Predicated region
        $region45: #{tpu_custom_call.1} parent=39 // pred_check
          %p2697 = pneg %p118
        $region46: #{tpu_custom_call.1} parent=39 // pred_check_branch
          %2699 = sbr.rel (%p2697) target = $region48
        $region47: #{tpu_custom_call.1} parent=39 // pred_region
          %s2700 = sand.u32 %s103, 1
          %s2701 = scalar_lea.sflag [#allocation5], %s2700
          %s2702 = sand.u32 %s103, 1
          %s2703 = smul.addr %s2702, 8
          %s2704 = scalar_lea.vmem [#allocation4], %s2703
          %2705 = dma.done %s2701, 128
        $region48: #{tpu_custom_call.1} parent=39 // pred_fallthru
          _
      $region40: #{tpu_custom_call.1} parent=5 // pred_fallthru
        _
    $region6: #{tpu_custom_call.1} parent=1 // loop_footer
      %s20 = sadd.s32 1, %s16
    $region7: #{tpu_custom_call.1} parent=1 // loop_footer_branch
      %15 = sbr.rel target = $region3
    $region8: #{tpu_custom_call.1} parent=1 // loop_exit
      _
    %2706 = vsyncpa [#allocation3], 1
    %s2707 = scalar_lea.sflag [#allocation3], 1
    %2708 = vsyncpa %s2707, 1
    %2709 = vsyncpa [#allocation5], 1
    %s2710 = scalar_lea.sflag [#allocation5], 1
    %2711 = vsyncpa %s2710, 1

</llo_original>
